<compile_context>
chip_gen: v7x
topology: tpu7x:2x2x1
jax: 0.10.0
libtpu: 0.0.40
codegen_flags: <defaults>
</compile_context>

<pallas_src>
import jax
import jax.numpy as jnp
import numpy as np
from jax.experimental import pallas as pl
from jax.experimental.pallas import tpu as pltpu

NUM_KPT = 68  # standard 68 facial landmarks


def _make_kpt_nme_kernel(num_kpt: int, bt: int, h: int, w: int):
    inv_k = 1.0 / float(num_kpt)

    def kernel(row_ref, col_ref, gt_ref, pr_ref, out_ref):
        # row_ref / col_ref : (K, 1)        int32 VMEM — keypoint row / col indices
        # gt_ref  / pr_ref  : (Bt, 3, H, W) f32   VMEM — GT / predicted position maps
        # out_ref           : (Bt, 1)       f32   SMEM — per-sample NME
        k = row_ref.shape[0]

        # Factorized one-hot selectors: ~K*(H+W) VPU elements (tiny), rebuilt
        # per step so the kernel stays correct under megacore grid sharding.
        row_oh = (jax.lax.broadcasted_iota(jnp.int32, (k, h), 1)
                  == row_ref[...]).astype(jnp.float32)             # (K, H)
        col_oh = (jax.lax.broadcasted_iota(jnp.int32, (k, w), 1)
                  == col_ref[...]).astype(jnp.float32)             # (K, W)

        def gather(ref, s, c):
            # Exact gather of map[row[k], col[k]]:
            #   rowOH(K, H) @ map(H, W) -> (K, W)   (MXU, lanes = W)
            #   mask with colOH and lane-reduce     (VPU + XLU)
            m = ref[s, c]                                          # (H, W)
            rows = jnp.dot(row_oh, m,
                           preferred_element_type=jnp.float32)     # (K, W)
            return jnp.sum(rows * col_oh, axis=-1, keepdims=True)  # (K, 1)

        for s in range(bt):
            gx = gather(gt_ref, s, 0)
            gy = gather(gt_ref, s, 1)
            gz = gather(gt_ref, s, 2)
            px = gather(pr_ref, s, 0)
            py = gather(pr_ref, s, 1)
            pz = gather(pr_ref, s, 2)

            dx = px - gx
            dy = py - gy
            # (pz - mean(pz)) - (gz - mean(gz)) == (pz - gz) - mean(pz - gz):
            # z-centering fused into a single cross-lane mean.
            dz = pz - gz
            dz = dz - jnp.mean(dz)

            dist = jnp.sum(jnp.sqrt(dx * dx + dy * dy + dz * dz)) * inv_k
            bbox = jnp.sqrt((jnp.max(gx) - jnp.min(gx)) *
                            (jnp.max(gy) - jnp.min(gy)))
            out_ref[s, 0] = dist / bbox

    return kernel


def _pick_samples_per_step(batch, c, h, w, budget_bytes=12 << 20):
    # 2 tensors x 2 pipeline buffers x Bt samples of (3, H, W) f32 must sit
    # comfortably under the smallest default scoped-VMEM budget (v5e: 16 MiB).
    per_sample = 2 * 2 * c * h * w * 4
    max_bt = max(1, budget_bytes // per_sample)
    bt = 1
    for cand in range(1, batch + 1):
        if batch % cand == 0 and cand <= max_bt:
            bt = cand
    return bt


def kpt_nme(y_true, y_pred, uv_kpt_ind):
    """y_true, y_pred: (B, 3, H, W) float32.  uv_kpt_ind: (K, 2) int32."""
    B, C, H, W = y_true.shape
    assert C == 3, "KptNME expects (x, y, z) position maps"
    K = uv_kpt_ind.shape[0]

    row_idx = uv_kpt_ind[:, 0].astype(jnp.int32).reshape(K, 1)
    col_idx = uv_kpt_ind[:, 1].astype(jnp.int32).reshape(K, 1)

    bt = _pick_samples_per_step(B, C, H, W)
    kernel = _make_kpt_nme_kernel(num_kpt=K, bt=bt, h=H, w=W)

    per_sample = pl.pallas_call(
        kernel,
        out_shape=jax.ShapeDtypeStruct((B, 1), jnp.float32),
        grid=(B // bt,),
        in_specs=[
            # Keypoint indices — same tiny block every grid step (no re-DMA).
            pl.BlockSpec((K, 1), lambda b: (0, 0)),
            pl.BlockSpec((K, 1), lambda b: (0, 0)),
            # Bt samples of each 4-D map per grid step (clean (8,128) tiling).
            pl.BlockSpec((bt, C, H, W), lambda b: (b, 0, 0, 0)),
            pl.BlockSpec((bt, C, H, W), lambda b: (b, 0, 0, 0)),
        ],
        out_specs=pl.BlockSpec((bt, 1), lambda b: (b, 0),
                               memory_space=pltpu.MemorySpace.SMEM),
        compiler_params=pltpu.CompilerParams(
            dimension_semantics=("parallel",)),
    )(row_idx, col_idx, y_true.astype(jnp.float32), y_pred.astype(jnp.float32))

    # Batch mean over the per-sample NMEs (trivially cheap in XLA).
    return jnp.mean(per_sample)


def _kpt_nme_ref(y_true, y_pred, uv_kpt_ind):
    """Pure-JAX reference mirroring the PyTorch forward."""
    gt = y_true[:, :, uv_kpt_ind[:, 0], uv_kpt_ind[:, 1]]
    pred = y_pred[:, :, uv_kpt_ind[:, 0], uv_kpt_ind[:, 1]]
    gt = gt.at[:, 2].set(gt[:, 2] - jnp.mean(gt[:, 2], axis=-1, keepdims=True))
    pred = pred.at[:, 2].set(pred[:, 2] - jnp.mean(pred[:, 2], axis=-1, keepdims=True))
    dist = jnp.mean(jnp.linalg.norm(pred - gt, axis=1), axis=1)
    left = jnp.min(gt[:, 0, :], axis=1)
    right = jnp.max(gt[:, 0, :], axis=1)
    top = jnp.min(gt[:, 1, :], axis=1)
    bottom = jnp.max(gt[:, 1, :], axis=1)
    bbox_size = jnp.sqrt((right - left) * (bottom - top))
    return jnp.mean(dist / bbox_size)


if __name__ == "__main__":
    B, C, H, W = 2, 3, 16, 16

    key = jax.random.PRNGKey(0)
    k1, k2, k3, k4 = jax.random.split(key, 4)

    # Deterministic synthetic 68-point landmark index table (stands in for the
    # uv_kpt_ind.txt global of the original repo).
    rows = jax.random.randint(k3, (NUM_KPT,), 0, H, dtype=jnp.int32)
    cols = jax.random.randint(k4, (NUM_KPT,), 0, W, dtype=jnp.int32)
    uv_kpt_ind = jnp.stack([rows, cols], axis=1)  # (68, 2)

    # Position maps: keep x/y values positive-ish so the bbox is well defined.
    y_true = jax.random.uniform(k1, (B, C, H, W), dtype=jnp.float32) * 16.0
    y_pred = y_true + 0.1 * jax.random.normal(k2, (B, C, H, W), dtype=jnp.float32)

    out = jax.block_until_ready(kpt_nme(y_true, y_pred, uv_kpt_ind))
    ref = jax.block_until_ready(_kpt_nme_ref(y_true, y_pred, uv_kpt_ind))

    np.testing.assert_allclose(np.asarray(out), np.asarray(ref), rtol=1e-5, atol=1e-5)
    print("KERNEL_OK")
</pallas_src>

<mosaic_0001>
module attributes {stable_mosaic.version = 11 : i64} {
  func.func @kernel(%arg0: i32, %arg1: memref<68x1xi32, #tpu.memory_space<vmem>>, %arg2: memref<68x1xi32, #tpu.memory_space<vmem>>, %arg3: memref<2x3x16x16xf32, #tpu.memory_space<vmem>>, %arg4: memref<2x3x16x16xf32, #tpu.memory_space<vmem>>, %arg5: memref<2x1xf32, #tpu.memory_space<smem>>) attributes {dimension_semantics = [#tpu.dimension_semantics<parallel>], iteration_bounds = array<i64: 1>, scalar_prefetch = 0 : i64, scratch_operands = 0 : i64, tpu.core_type = #tpu.core_type<tc>, window_params = [{pipeline_mode = #tpu.pipeline_mode<synchronous>, transform_indices = @transform_0, window_bounds = array<i64: 68, 1>}, {pipeline_mode = #tpu.pipeline_mode<synchronous>, transform_indices = @transform_1, window_bounds = array<i64: 68, 1>}, {transform_indices = @transform_2, window_bounds = array<i64: 2, 3, 16, 16>}, {transform_indices = @transform_3, window_bounds = array<i64: 2, 3, 16, 16>}, {transform_indices = @transform_4, window_bounds = array<i64: 2, 1>}]} {
    %0 = tpu.iota {dimensions = array<i32: 1>} : vector<68x16xi32>
    %c0 = arith.constant 0 : index
    %c0_0 = arith.constant 0 : index
    %1 = vector.load %arg1[%c0, %c0_0] : memref<68x1xi32, #tpu.memory_space<vmem>>, vector<68x1xi32>
    %2 = vector.broadcast %1 : vector<68x1xi32> to vector<68x16xi32>
    %3 = arith.cmpi eq, %0, %2 : vector<68x16xi32>
    %4 = arith.extui %3 : vector<68x16xi1> to vector<68x16xi32>
    %5 = arith.sitofp %4 : vector<68x16xi32> to vector<68x16xf32>
    %6 = tpu.iota {dimensions = array<i32: 1>} : vector<68x16xi32>
    %c0_1 = arith.constant 0 : index
    %c0_2 = arith.constant 0 : index
    %7 = vector.load %arg2[%c0_1, %c0_2] : memref<68x1xi32, #tpu.memory_space<vmem>>, vector<68x1xi32>
    %8 = vector.broadcast %7 : vector<68x1xi32> to vector<68x16xi32>
    %9 = arith.cmpi eq, %6, %8 : vector<68x16xi32>
    %10 = arith.extui %9 : vector<68x16xi1> to vector<68x16xi32>
    %11 = arith.sitofp %10 : vector<68x16xi32> to vector<68x16xf32>
    %c0_3 = arith.constant 0 : index
    %c0_4 = arith.constant 0 : index
    %c0_5 = arith.constant 0 : index
    %c0_6 = arith.constant 0 : index
    %12 = vector.load %arg3[%c0_3, %c0_4, %c0_5, %c0_6] : memref<2x3x16x16xf32, #tpu.memory_space<vmem>>, vector<1x1x16x16xf32>
    %13 = vector.shape_cast %12 : vector<1x1x16x16xf32> to vector<16x16xf32>
    %cst = arith.constant dense<0.000000e+00> : vector<68x16xf32>
    %14 = tpu.matmul %5, %13, %cst {dimension_numbers = #tpu.dot_dimension_numbers<[1], [0], [0], [1], [0, 0, 1, 1], [], []>} : vector<68x16xf32>, vector<16x16xf32>, vector<68x16xf32> -> vector<68x16xf32>
    %15 = arith.mulf %14, %11 : vector<68x16xf32>
    %cst_7 = arith.constant dense<0.000000e+00> : vector<68xf32>
    %16 = vector.multi_reduction <add>, %15, %cst_7 [1] : vector<68x16xf32> to vector<68xf32>
    %17 = vector.shape_cast %16 : vector<68xf32> to vector<68x1xf32>
    %c0_8 = arith.constant 0 : index
    %c1 = arith.constant 1 : index
    %c0_9 = arith.constant 0 : index
    %c0_10 = arith.constant 0 : index
    %18 = vector.load %arg3[%c0_8, %c1, %c0_9, %c0_10] : memref<2x3x16x16xf32, #tpu.memory_space<vmem>>, vector<1x1x16x16xf32>
    %19 = vector.shape_cast %18 : vector<1x1x16x16xf32> to vector<16x16xf32>
    %cst_11 = arith.constant dense<0.000000e+00> : vector<68x16xf32>
    %20 = tpu.matmul %5, %19, %cst_11 {dimension_numbers = #tpu.dot_dimension_numbers<[1], [0], [0], [1], [0, 0, 1, 1], [], []>} : vector<68x16xf32>, vector<16x16xf32>, vector<68x16xf32> -> vector<68x16xf32>
    %21 = arith.mulf %20, %11 : vector<68x16xf32>
    %cst_12 = arith.constant dense<0.000000e+00> : vector<68xf32>
    %22 = vector.multi_reduction <add>, %21, %cst_12 [1] : vector<68x16xf32> to vector<68xf32>
    %23 = vector.shape_cast %22 : vector<68xf32> to vector<68x1xf32>
    %c0_13 = arith.constant 0 : index
    %c2 = arith.constant 2 : index
    %c0_14 = arith.constant 0 : index
    %c0_15 = arith.constant 0 : index
    %24 = vector.load %arg3[%c0_13, %c2, %c0_14, %c0_15] : memref<2x3x16x16xf32, #tpu.memory_space<vmem>>, vector<1x1x16x16xf32>
    %25 = vector.shape_cast %24 : vector<1x1x16x16xf32> to vector<16x16xf32>
    %cst_16 = arith.constant dense<0.000000e+00> : vector<68x16xf32>
    %26 = tpu.matmul %5, %25, %cst_16 {dimension_numbers = #tpu.dot_dimension_numbers<[1], [0], [0], [1], [0, 0, 1, 1], [], []>} : vector<68x16xf32>, vector<16x16xf32>, vector<68x16xf32> -> vector<68x16xf32>
    %27 = arith.mulf %26, %11 : vector<68x16xf32>
    %cst_17 = arith.constant dense<0.000000e+00> : vector<68xf32>
    %28 = vector.multi_reduction <add>, %27, %cst_17 [1] : vector<68x16xf32> to vector<68xf32>
    %29 = vector.shape_cast %28 : vector<68xf32> to vector<68x1xf32>
    %c0_18 = arith.constant 0 : index
    %c0_19 = arith.constant 0 : index
    %c0_20 = arith.constant 0 : index
    %c0_21 = arith.constant 0 : index
    %30 = vector.load %arg4[%c0_18, %c0_19, %c0_20, %c0_21] : memref<2x3x16x16xf32, #tpu.memory_space<vmem>>, vector<1x1x16x16xf32>
    %31 = vector.shape_cast %30 : vector<1x1x16x16xf32> to vector<16x16xf32>
    %cst_22 = arith.constant dense<0.000000e+00> : vector<68x16xf32>
    %32 = tpu.matmul %5, %31, %cst_22 {dimension_numbers = #tpu.dot_dimension_numbers<[1], [0], [0], [1], [0, 0, 1, 1], [], []>} : vector<68x16xf32>, vector<16x16xf32>, vector<68x16xf32> -> vector<68x16xf32>
    %33 = arith.mulf %32, %11 : vector<68x16xf32>
    %cst_23 = arith.constant dense<0.000000e+00> : vector<68xf32>
    %34 = vector.multi_reduction <add>, %33, %cst_23 [1] : vector<68x16xf32> to vector<68xf32>
    %35 = vector.shape_cast %34 : vector<68xf32> to vector<68x1xf32>
    %c0_24 = arith.constant 0 : index
    %c1_25 = arith.constant 1 : index
    %c0_26 = arith.constant 0 : index
    %c0_27 = arith.constant 0 : index
    %36 = vector.load %arg4[%c0_24, %c1_25, %c0_26, %c0_27] : memref<2x3x16x16xf32, #tpu.memory_space<vmem>>, vector<1x1x16x16xf32>
    %37 = vector.shape_cast %36 : vector<1x1x16x16xf32> to vector<16x16xf32>
    %cst_28 = arith.constant dense<0.000000e+00> : vector<68x16xf32>
    %38 = tpu.matmul %5, %37, %cst_28 {dimension_numbers = #tpu.dot_dimension_numbers<[1], [0], [0], [1], [0, 0, 1, 1], [], []>} : vector<68x16xf32>, vector<16x16xf32>, vector<68x16xf32> -> vector<68x16xf32>
    %39 = arith.mulf %38, %11 : vector<68x16xf32>
    %cst_29 = arith.constant dense<0.000000e+00> : vector<68xf32>
    %40 = vector.multi_reduction <add>, %39, %cst_29 [1] : vector<68x16xf32> to vector<68xf32>
    %41 = vector.shape_cast %40 : vector<68xf32> to vector<68x1xf32>
    %c0_30 = arith.constant 0 : index
    %c2_31 = arith.constant 2 : index
    %c0_32 = arith.constant 0 : index
    %c0_33 = arith.constant 0 : index
    %42 = vector.load %arg4[%c0_30, %c2_31, %c0_32, %c0_33] : memref<2x3x16x16xf32, #tpu.memory_space<vmem>>, vector<1x1x16x16xf32>
    %43 = vector.shape_cast %42 : vector<1x1x16x16xf32> to vector<16x16xf32>
    %cst_34 = arith.constant dense<0.000000e+00> : vector<68x16xf32>
    %44 = tpu.matmul %5, %43, %cst_34 {dimension_numbers = #tpu.dot_dimension_numbers<[1], [0], [0], [1], [0, 0, 1, 1], [], []>} : vector<68x16xf32>, vector<16x16xf32>, vector<68x16xf32> -> vector<68x16xf32>
    %45 = arith.mulf %44, %11 : vector<68x16xf32>
    %cst_35 = arith.constant dense<0.000000e+00> : vector<68xf32>
    %46 = vector.multi_reduction <add>, %45, %cst_35 [1] : vector<68x16xf32> to vector<68xf32>
    %47 = vector.shape_cast %46 : vector<68xf32> to vector<68x1xf32>
    %48 = arith.subf %35, %17 : vector<68x1xf32>
    %49 = arith.subf %41, %23 : vector<68x1xf32>
    %50 = arith.subf %47, %29 : vector<68x1xf32>
    %51 = vector.shape_cast %50 : vector<68x1xf32> to vector<1x68x1xf32>
    %cst_36 = arith.constant dense<0.000000e+00> : vector<1xf32>
    %52 = vector.multi_reduction <add>, %51, %cst_36 [1, 2] : vector<1x68x1xf32> to vector<1xf32>
    %53 = vector.shape_cast %52 : vector<1xf32> to vector<1x1x1xf32>
    %54 = vector.extract %53[0, 0, 0] : f32 from vector<1x1x1xf32>
    %cst_37 = arith.constant 6.800000e+01 : f32
    %55 = arith.divf %54, %cst_37 : f32
    %56 = vector.broadcast %55 : f32 to vector<68x1xf32>
    %57 = arith.subf %50, %56 : vector<68x1xf32>
    %58 = arith.mulf %48, %48 : vector<68x1xf32>
    %59 = arith.mulf %49, %49 : vector<68x1xf32>
    %60 = arith.addf %58, %59 : vector<68x1xf32>
    %61 = arith.mulf %57, %57 : vector<68x1xf32>
    %62 = arith.addf %60, %61 : vector<68x1xf32>
    %63 = math.sqrt %62 : vector<68x1xf32>
    %64 = vector.shape_cast %63 : vector<68x1xf32> to vector<1x68x1xf32>
    %cst_38 = arith.constant dense<0.000000e+00> : vector<1xf32>
    %65 = vector.multi_reduction <add>, %64, %cst_38 [1, 2] : vector<1x68x1xf32> to vector<1xf32>
    %66 = vector.shape_cast %65 : vector<1xf32> to vector<1x1x1xf32>
    %67 = vector.extract %66[0, 0, 0] : f32 from vector<1x1x1xf32>
    %cst_39 = arith.constant 0.0147058824 : f32
    %68 = arith.mulf %67, %cst_39 : f32
    %69 = vector.shape_cast %17 : vector<68x1xf32> to vector<1x68x1xf32>
    %cst_40 = arith.constant dense<0xFF800000> : vector<1xf32>
    %70 = vector.multi_reduction <maximumf>, %69, %cst_40 [1, 2] : vector<1x68x1xf32> to vector<1xf32>
    %71 = vector.shape_cast %70 : vector<1xf32> to vector<1x1x1xf32>
    %72 = vector.extract %71[0, 0, 0] : f32 from vector<1x1x1xf32>
    %73 = vector.shape_cast %17 : vector<68x1xf32> to vector<1x68x1xf32>
    %cst_41 = arith.constant dense<0x7F800000> : vector<1xf32>
    %74 = vector.multi_reduction <minimumf>, %73, %cst_41 [1, 2] : vector<1x68x1xf32> to vector<1xf32>
    %75 = vector.shape_cast %74 : vector<1xf32> to vector<1x1x1xf32>
    %76 = vector.extract %75[0, 0, 0] : f32 from vector<1x1x1xf32>
    %77 = arith.subf %72, %76 : f32
    %78 = vector.shape_cast %23 : vector<68x1xf32> to vector<1x68x1xf32>
    %cst_42 = arith.constant dense<0xFF800000> : vector<1xf32>
    %79 = vector.multi_reduction <maximumf>, %78, %cst_42 [1, 2] : vector<1x68x1xf32> to vector<1xf32>
    %80 = vector.shape_cast %79 : vector<1xf32> to vector<1x1x1xf32>
    %81 = vector.extract %80[0, 0, 0] : f32 from vector<1x1x1xf32>
    %82 = vector.shape_cast %23 : vector<68x1xf32> to vector<1x68x1xf32>
    %cst_43 = arith.constant dense<0x7F800000> : vector<1xf32>
    %83 = vector.multi_reduction <minimumf>, %82, %cst_43 [1, 2] : vector<1x68x1xf32> to vector<1xf32>
    %84 = vector.shape_cast %83 : vector<1xf32> to vector<1x1x1xf32>
    %85 = vector.extract %84[0, 0, 0] : f32 from vector<1x1x1xf32>
    %86 = arith.subf %81, %85 : f32
    %87 = arith.mulf %77, %86 : f32
    %88 = math.sqrt %87 : f32
    %89 = arith.divf %68, %88 : f32
    %c0_44 = arith.constant 0 : index
    %c0_45 = arith.constant 0 : index
    %90 = memref.load %arg5[%c0_44, %c0_45] : memref<2x1xf32, #tpu.memory_space<smem>>
    memref.store %89, %arg5[%c0_44, %c0_45] : memref<2x1xf32, #tpu.memory_space<smem>>
    %c1_46 = arith.constant 1 : index
    %c0_47 = arith.constant 0 : index
    %c0_48 = arith.constant 0 : index
    %c0_49 = arith.constant 0 : index
    %91 = vector.load %arg3[%c1_46, %c0_47, %c0_48, %c0_49] : memref<2x3x16x16xf32, #tpu.memory_space<vmem>>, vector<1x1x16x16xf32>
    %92 = vector.shape_cast %91 : vector<1x1x16x16xf32> to vector<16x16xf32>
    %cst_50 = arith.constant dense<0.000000e+00> : vector<68x16xf32>
    %93 = tpu.matmul %5, %92, %cst_50 {dimension_numbers = #tpu.dot_dimension_numbers<[1], [0], [0], [1], [0, 0, 1, 1], [], []>} : vector<68x16xf32>, vector<16x16xf32>, vector<68x16xf32> -> vector<68x16xf32>
    %94 = arith.mulf %93, %11 : vector<68x16xf32>
    %cst_51 = arith.constant dense<0.000000e+00> : vector<68xf32>
    %95 = vector.multi_reduction <add>, %94, %cst_51 [1] : vector<68x16xf32> to vector<68xf32>
    %96 = vector.shape_cast %95 : vector<68xf32> to vector<68x1xf32>
    %c1_52 = arith.constant 1 : index
    %c1_53 = arith.constant 1 : index
    %c0_54 = arith.constant 0 : index
    %c0_55 = arith.constant 0 : index
    %97 = vector.load %arg3[%c1_52, %c1_53, %c0_54, %c0_55] : memref<2x3x16x16xf32, #tpu.memory_space<vmem>>, vector<1x1x16x16xf32>
    %98 = vector.shape_cast %97 : vector<1x1x16x16xf32> to vector<16x16xf32>
    %cst_56 = arith.constant dense<0.000000e+00> : vector<68x16xf32>
    %99 = tpu.matmul %5, %98, %cst_56 {dimension_numbers = #tpu.dot_dimension_numbers<[1], [0], [0], [1], [0, 0, 1, 1], [], []>} : vector<68x16xf32>, vector<16x16xf32>, vector<68x16xf32> -> vector<68x16xf32>
    %100 = arith.mulf %99, %11 : vector<68x16xf32>
    %cst_57 = arith.constant dense<0.000000e+00> : vector<68xf32>
    %101 = vector.multi_reduction <add>, %100, %cst_57 [1] : vector<68x16xf32> to vector<68xf32>
    %102 = vector.shape_cast %101 : vector<68xf32> to vector<68x1xf32>
    %c1_58 = arith.constant 1 : index
    %c2_59 = arith.constant 2 : index
    %c0_60 = arith.constant 0 : index
    %c0_61 = arith.constant 0 : index
    %103 = vector.load %arg3[%c1_58, %c2_59, %c0_60, %c0_61] : memref<2x3x16x16xf32, #tpu.memory_space<vmem>>, vector<1x1x16x16xf32>
    %104 = vector.shape_cast %103 : vector<1x1x16x16xf32> to vector<16x16xf32>
    %cst_62 = arith.constant dense<0.000000e+00> : vector<68x16xf32>
    %105 = tpu.matmul %5, %104, %cst_62 {dimension_numbers = #tpu.dot_dimension_numbers<[1], [0], [0], [1], [0, 0, 1, 1], [], []>} : vector<68x16xf32>, vector<16x16xf32>, vector<68x16xf32> -> vector<68x16xf32>
    %106 = arith.mulf %105, %11 : vector<68x16xf32>
    %cst_63 = arith.constant dense<0.000000e+00> : vector<68xf32>
    %107 = vector.multi_reduction <add>, %106, %cst_63 [1] : vector<68x16xf32> to vector<68xf32>
    %108 = vector.shape_cast %107 : vector<68xf32> to vector<68x1xf32>
    %c1_64 = arith.constant 1 : index
    %c0_65 = arith.constant 0 : index
    %c0_66 = arith.constant 0 : index
    %c0_67 = arith.constant 0 : index
    %109 = vector.load %arg4[%c1_64, %c0_65, %c0_66, %c0_67] : memref<2x3x16x16xf32, #tpu.memory_space<vmem>>, vector<1x1x16x16xf32>
    %110 = vector.shape_cast %109 : vector<1x1x16x16xf32> to vector<16x16xf32>
    %cst_68 = arith.constant dense<0.000000e+00> : vector<68x16xf32>
    %111 = tpu.matmul %5, %110, %cst_68 {dimension_numbers = #tpu.dot_dimension_numbers<[1], [0], [0], [1], [0, 0, 1, 1], [], []>} : vector<68x16xf32>, vector<16x16xf32>, vector<68x16xf32> -> vector<68x16xf32>
    %112 = arith.mulf %111, %11 : vector<68x16xf32>
    %cst_69 = arith.constant dense<0.000000e+00> : vector<68xf32>
    %113 = vector.multi_reduction <add>, %112, %cst_69 [1] : vector<68x16xf32> to vector<68xf32>
    %114 = vector.shape_cast %113 : vector<68xf32> to vector<68x1xf32>
    %c1_70 = arith.constant 1 : index
    %c1_71 = arith.constant 1 : index
    %c0_72 = arith.constant 0 : index
    %c0_73 = arith.constant 0 : index
    %115 = vector.load %arg4[%c1_70, %c1_71, %c0_72, %c0_73] : memref<2x3x16x16xf32, #tpu.memory_space<vmem>>, vector<1x1x16x16xf32>
    %116 = vector.shape_cast %115 : vector<1x1x16x16xf32> to vector<16x16xf32>
    %cst_74 = arith.constant dense<0.000000e+00> : vector<68x16xf32>
    %117 = tpu.matmul %5, %116, %cst_74 {dimension_numbers = #tpu.dot_dimension_numbers<[1], [0], [0], [1], [0, 0, 1, 1], [], []>} : vector<68x16xf32>, vector<16x16xf32>, vector<68x16xf32> -> vector<68x16xf32>
    %118 = arith.mulf %117, %11 : vector<68x16xf32>
    %cst_75 = arith.constant dense<0.000000e+00> : vector<68xf32>
    %119 = vector.multi_reduction <add>, %118, %cst_75 [1] : vector<68x16xf32> to vector<68xf32>
    %120 = vector.shape_cast %119 : vector<68xf32> to vector<68x1xf32>
    %c1_76 = arith.constant 1 : index
    %c2_77 = arith.constant 2 : index
    %c0_78 = arith.constant 0 : index
    %c0_79 = arith.constant 0 : index
    %121 = vector.load %arg4[%c1_76, %c2_77, %c0_78, %c0_79] : memref<2x3x16x16xf32, #tpu.memory_space<vmem>>, vector<1x1x16x16xf32>
    %122 = vector.shape_cast %121 : vector<1x1x16x16xf32> to vector<16x16xf32>
    %cst_80 = arith.constant dense<0.000000e+00> : vector<68x16xf32>
    %123 = tpu.matmul %5, %122, %cst_80 {dimension_numbers = #tpu.dot_dimension_numbers<[1], [0], [0], [1], [0, 0, 1, 1], [], []>} : vector<68x16xf32>, vector<16x16xf32>, vector<68x16xf32> -> vector<68x16xf32>
    %124 = arith.mulf %123, %11 : vector<68x16xf32>
    %cst_81 = arith.constant dense<0.000000e+00> : vector<68xf32>
    %125 = vector.multi_reduction <add>, %124, %cst_81 [1] : vector<68x16xf32> to vector<68xf32>
    %126 = vector.shape_cast %125 : vector<68xf32> to vector<68x1xf32>
    %127 = arith.subf %114, %96 : vector<68x1xf32>
    %128 = arith.subf %120, %102 : vector<68x1xf32>
    %129 = arith.subf %126, %108 : vector<68x1xf32>
    %130 = vector.shape_cast %129 : vector<68x1xf32> to vector<1x68x1xf32>
    %cst_82 = arith.constant dense<0.000000e+00> : vector<1xf32>
    %131 = vector.multi_reduction <add>, %130, %cst_82 [1, 2] : vector<1x68x1xf32> to vector<1xf32>
    %132 = vector.shape_cast %131 : vector<1xf32> to vector<1x1x1xf32>
    %133 = vector.extract %132[0, 0, 0] : f32 from vector<1x1x1xf32>
    %cst_83 = arith.constant 6.800000e+01 : f32
    %134 = arith.divf %133, %cst_83 : f32
    %135 = vector.broadcast %134 : f32 to vector<68x1xf32>
    %136 = arith.subf %129, %135 : vector<68x1xf32>
    %137 = arith.mulf %127, %127 : vector<68x1xf32>
    %138 = arith.mulf %128, %128 : vector<68x1xf32>
    %139 = arith.addf %137, %138 : vector<68x1xf32>
    %140 = arith.mulf %136, %136 : vector<68x1xf32>
    %141 = arith.addf %139, %140 : vector<68x1xf32>
    %142 = math.sqrt %141 : vector<68x1xf32>
    %143 = vector.shape_cast %142 : vector<68x1xf32> to vector<1x68x1xf32>
    %cst_84 = arith.constant dense<0.000000e+00> : vector<1xf32>
    %144 = vector.multi_reduction <add>, %143, %cst_84 [1, 2] : vector<1x68x1xf32> to vector<1xf32>
    %145 = vector.shape_cast %144 : vector<1xf32> to vector<1x1x1xf32>
    %146 = vector.extract %145[0, 0, 0] : f32 from vector<1x1x1xf32>
    %cst_85 = arith.constant 0.0147058824 : f32
    %147 = arith.mulf %146, %cst_85 : f32
    %148 = vector.shape_cast %96 : vector<68x1xf32> to vector<1x68x1xf32>
    %cst_86 = arith.constant dense<0xFF800000> : vector<1xf32>
    %149 = vector.multi_reduction <maximumf>, %148, %cst_86 [1, 2] : vector<1x68x1xf32> to vector<1xf32>
    %150 = vector.shape_cast %149 : vector<1xf32> to vector<1x1x1xf32>
    %151 = vector.extract %150[0, 0, 0] : f32 from vector<1x1x1xf32>
    %152 = vector.shape_cast %96 : vector<68x1xf32> to vector<1x68x1xf32>
    %cst_87 = arith.constant dense<0x7F800000> : vector<1xf32>
    %153 = vector.multi_reduction <minimumf>, %152, %cst_87 [1, 2] : vector<1x68x1xf32> to vector<1xf32>
    %154 = vector.shape_cast %153 : vector<1xf32> to vector<1x1x1xf32>
    %155 = vector.extract %154[0, 0, 0] : f32 from vector<1x1x1xf32>
    %156 = arith.subf %151, %155 : f32
    %157 = vector.shape_cast %102 : vector<68x1xf32> to vector<1x68x1xf32>
    %cst_88 = arith.constant dense<0xFF800000> : vector<1xf32>
    %158 = vector.multi_reduction <maximumf>, %157, %cst_88 [1, 2] : vector<1x68x1xf32> to vector<1xf32>
    %159 = vector.shape_cast %158 : vector<1xf32> to vector<1x1x1xf32>
    %160 = vector.extract %159[0, 0, 0] : f32 from vector<1x1x1xf32>
    %161 = vector.shape_cast %102 : vector<68x1xf32> to vector<1x68x1xf32>
    %cst_89 = arith.constant dense<0x7F800000> : vector<1xf32>
    %162 = vector.multi_reduction <minimumf>, %161, %cst_89 [1, 2] : vector<1x68x1xf32> to vector<1xf32>
    %163 = vector.shape_cast %162 : vector<1xf32> to vector<1x1x1xf32>
    %164 = vector.extract %163[0, 0, 0] : f32 from vector<1x1x1xf32>
    %165 = arith.subf %160, %164 : f32
    %166 = arith.mulf %156, %165 : f32
    %167 = math.sqrt %166 : f32
    %168 = arith.divf %147, %167 : f32
    %c1_90 = arith.constant 1 : index
    %c0_91 = arith.constant 0 : index
    %169 = memref.load %arg5[%c1_90, %c0_91] : memref<2x1xf32, #tpu.memory_space<smem>>
    memref.store %168, %arg5[%c1_90, %c0_91] : memref<2x1xf32, #tpu.memory_space<smem>>
    return
  }
  func.func @transform_0(%arg0: i32) -> (i32, i32) {
    %c0_i32 = arith.constant 0 : i32
    %c0_i32_0 = arith.constant 0 : i32
    %c0_i32_1 = arith.constant 0 : i32
    return %c0_i32, %c0_i32_0 : i32, i32
  }
  func.func @transform_1(%arg0: i32) -> (i32, i32) {
    %c0_i32 = arith.constant 0 : i32
    %c0_i32_0 = arith.constant 0 : i32
    %c0_i32_1 = arith.constant 0 : i32
    return %c0_i32, %c0_i32_0 : i32, i32
  }
  func.func @transform_2(%arg0: i32) -> (i32, i32, i32, i32) {
    %c0_i32 = arith.constant 0 : i32
    %c0_i32_0 = arith.constant 0 : i32
    %c0_i32_1 = arith.constant 0 : i32
    %c0_i32_2 = arith.constant 0 : i32
    return %arg0, %c0_i32, %c0_i32_0, %c0_i32_1 : i32, i32, i32, i32
  }
  func.func @transform_3(%arg0: i32) -> (i32, i32, i32, i32) {
    %c0_i32 = arith.constant 0 : i32
    %c0_i32_0 = arith.constant 0 : i32
    %c0_i32_1 = arith.constant 0 : i32
    %c0_i32_2 = arith.constant 0 : i32
    return %arg0, %c0_i32, %c0_i32_0, %c0_i32_1 : i32, i32, i32, i32
  }
  func.func @transform_4(%arg0: i32) -> (i32, i32) {
    %c0_i32 = arith.constant 0 : i32
    %c0_i32_0 = arith.constant 0 : i32
    return %arg0, %c0_i32 : i32, i32
  }
}

</mosaic_0001>

<llo_original>
// kernel: tpu_custom_call.1
$region0: #{tpu_custom_call.1}
  #allocation0 [shape = 'u32[]', space=smem, size = 0x4, offset = 0x4, fixed_abs, tag = 'smem constant byte address 0x4 - core index']
  #allocation1 [shape = 'u32[144,128]{1,0:T(1,128)}', space=vmem, size = 0x12000, scoped, tag = 'internal scratch']
  %s0 = inlined_call_operand.vmem [shape: s32[68,1], index: 0, kind: input, shape index: {}]
  %s1 = inlined_call_operand.vmem [shape: s32[68,1], index: 1, kind: input, shape index: {}]
  %s2 = inlined_call_operand.vmem [shape: f32[2,3,16,16], index: 2, kind: input, shape index: {}]
  %s3 = inlined_call_operand.hbm [shape: f32[2,3,16,16], index: 3, kind: input, shape index: {}]
  %s4 = inlined_call_operand.vmem [shape: f32[2,1], index: 4, kind: output, shape index: {}]
  %s5 = sld [smem:[#allocation0]]
  $region30: #{tpu_custom_call.1} parent=0
    _
  %s7 = ssub.s32 1, %s5
  %s8 = scalar_select 0, %s7, %s5
  $region1: #{tpu_custom_call.1} parent=0
    #allocation2 [shape = 'u8[49152]{0}', space=vmem, size = 0xc000, scoped, tag = 'input window, operand 3, single buffered']
    #allocation3 [shape = 's32[1]{0}', space=sflag, size = 0x4, scoped, tag = 'scoped memory for tpu_custom_call.1']
    #allocation4 [shape = 's32[1]{0}', space=sflag, size = 0x4, scoped, tag = 'scoped memory for tpu_custom_call.1']
    #allocation5 [shape = 'u8[1024]{0}', space=smem, size = 0x400, scoped, tag = 'output window, operand 0, single buffered']
    %9 = vsyncpa [#allocation3], 0
    %10 = vsyncpa [#allocation4], 0
    // Predicated region
    $region2: #{tpu_custom_call.1} parent=1 // pred_check
      _
    $region3: #{tpu_custom_call.1} parent=1 // pred_check_branch
      %12 = sbr.rel (0) target = $region5
    $region4: #{tpu_custom_call.1} parent=1 // pred_region
      _
    $region5: #{tpu_custom_call.1} parent=1 // pred_fallthru
      _
    // Predicated region
    $region6: #{tpu_custom_call.1} parent=1 // pred_check
      _
    $region7: #{tpu_custom_call.1} parent=1 // pred_check_branch
      %14 = sbr.rel (0) target = $region9
    $region8: #{tpu_custom_call.1} parent=1 // pred_region
      _
    $region9: #{tpu_custom_call.1} parent=1 // pred_fallthru
      _
    // Predicated region
    $region10: #{tpu_custom_call.1} parent=1 // pred_check
      _
    $region11: #{tpu_custom_call.1} parent=1 // pred_check_branch
      %16 = sbr.rel (0) target = $region13
    $region12: #{tpu_custom_call.1} parent=1 // pred_region
      _
    $region13: #{tpu_custom_call.1} parent=1 // pred_fallthru
      _
    // Predicated region
    $region14: #{tpu_custom_call.1} parent=1 // pred_check
      _
    $region15: #{tpu_custom_call.1} parent=1 // pred_check_branch
      %18 = sbr.rel (0) target = $region17
    $region16: #{tpu_custom_call.1} parent=1 // pred_region
      %s20 = ssub.s32 1536, 1536
      %21 = vsyncadd [#allocation3], %s20
      %s22 = sshll.u32 [#allocation2], 4
      %s23 = int_to_ptr.vmem [resolvable:$true] %s22
      %28 = dma.hbm_to_vmem [thread:$0]  %s3, 1536, %s23, [#allocation3], 128, 128, 8
    $region17: #{tpu_custom_call.1} parent=1 // pred_fallthru
      _
    // Predicated region
    $region18: #{tpu_custom_call.1} parent=1 // pred_check
      _
    $region19: #{tpu_custom_call.1} parent=1 // pred_check_branch
      %30 = sbr.rel (0) target = $region21
    $region20: #{tpu_custom_call.1} parent=1 // pred_region
      %31 = dma.done [#allocation3], 1536
    $region21: #{tpu_custom_call.1} parent=1 // pred_fallthru
      _
    %v32 = vlaneseq
    %v33 = vand.u32 %v32, 127
    %v34 = vld [vmem:[%s0] sm:$0xff]
    %v35 = vld [vmem:[%s0 + $0x8] sm:$0xff]
    %v36 = vld [vmem:[%s0 + $0x10] sm:$0xff]
    %v37 = vld [vmem:[%s0 + $0x18] sm:$0xff]
    %v38 = vld [vmem:[%s0 + $0x20] sm:$0xff]
    %v39 = vld [vmem:[%s0 + $0x28] sm:$0xff]
    %v40 = vld [vmem:[%s0 + $0x30] sm:$0xff]
    %v41 = vld [vmem:[%s0 + $0x38] sm:$0xff]
    %v42 = vld [vmem:[%s0 + $0x40] sm:$0xf]
    %43 = vset.pattern.permute.xlu0 0
    %44 = vperm.xlu0 %43, %v34
    %v45 = vpop.permute.xlu0 %44
    %46 = vset.pattern.permute.xlu0 0
    %47 = vperm.xlu0 %46, %v35
    %v48 = vpop.permute.xlu0 %47
    %49 = vset.pattern.permute.xlu0 0
    %50 = vperm.xlu0 %49, %v36
    %v51 = vpop.permute.xlu0 %50
    %52 = vset.pattern.permute.xlu0 0
    %53 = vperm.xlu0 %52, %v37
    %v54 = vpop.permute.xlu0 %53
    %55 = vset.pattern.permute.xlu0 0
    %56 = vperm.xlu0 %55, %v38
    %v57 = vpop.permute.xlu0 %56
    %58 = vset.pattern.permute.xlu0 0
    %59 = vperm.xlu0 %58, %v39
    %v60 = vpop.permute.xlu0 %59
    %61 = vset.pattern.permute.xlu0 0
    %62 = vperm.xlu0 %61, %v40
    %v63 = vpop.permute.xlu0 %62
    %64 = vset.pattern.permute.xlu0 0
    %65 = vperm.xlu0 %64, %v41
    %v66 = vpop.permute.xlu0 %65
    %67 = vset.pattern.permute.xlu0 0
    %68 = vperm.xlu0 %67, %v42
    %v69 = vpop.permute.xlu0 %68
    %vm70 = vcmp.eq.s32.totalorder %v33, %v45
    %vm71 = vcmp.eq.s32.totalorder %v33, %v48
    %vm72 = vcmp.eq.s32.totalorder %v33, %v51
    %vm73 = vcmp.eq.s32.totalorder %v33, %v54
    %vm74 = vcmp.eq.s32.totalorder %v33, %v57
    %vm75 = vcmp.eq.s32.totalorder %v33, %v60
    %vm76 = vcmp.eq.s32.totalorder %v33, %v63
    %vm77 = vcmp.eq.s32.totalorder %v33, %v66
    %vm78 = vcmp.eq.s32.totalorder %v33, %v69
    %v79 = vsel %vm70, 1, 0
    %v80 = vsel %vm71, 1, 0
    %v81 = vsel %vm72, 1, 0
    %v82 = vsel %vm73, 1, 0
    %v83 = vsel %vm74, 1, 0
    %v84 = vsel %vm75, 1, 0
    %v85 = vsel %vm76, 1, 0
    %v86 = vsel %vm77, 1, 0
    %v87 = vsel %vm78, 1, 0
    %v88 = vcvt.s32.f32 %v79
    %v89 = vcvt.s32.f32 %v80
    %v90 = vcvt.s32.f32 %v81
    %v91 = vcvt.s32.f32 %v82
    %v92 = vcvt.s32.f32 %v83
    %v93 = vcvt.s32.f32 %v84
    %v94 = vcvt.s32.f32 %v85
    %v95 = vcvt.s32.f32 %v86
    %v96 = vcvt.s32.f32 %v87
    %v97 = vld [vmem:[%s1] sm:$0xff]
    %v98 = vld [vmem:[%s1 + $0x8] sm:$0xff]
    %v99 = vld [vmem:[%s1 + $0x10] sm:$0xff]
    %v100 = vld [vmem:[%s1 + $0x18] sm:$0xff]
    %v101 = vld [vmem:[%s1 + $0x20] sm:$0xff]
    %v102 = vld [vmem:[%s1 + $0x28] sm:$0xff]
    %v103 = vld [vmem:[%s1 + $0x30] sm:$0xff]
    %v104 = vld [vmem:[%s1 + $0x38] sm:$0xff]
    %v105 = vld [vmem:[%s1 + $0x40] sm:$0xf]
    %106 = vset.pattern.permute.xlu0 0
    %107 = vperm.xlu0 %106, %v97
    %v108 = vpop.permute.xlu0 %107
    %109 = vset.pattern.permute.xlu0 0
    %110 = vperm.xlu0 %109, %v98
    %v111 = vpop.permute.xlu0 %110
    %112 = vset.pattern.permute.xlu0 0
    %113 = vperm.xlu0 %112, %v99
    %v114 = vpop.permute.xlu0 %113
    %115 = vset.pattern.permute.xlu0 0
    %116 = vperm.xlu0 %115, %v100
    %v117 = vpop.permute.xlu0 %116
    %118 = vset.pattern.permute.xlu0 0
    %119 = vperm.xlu0 %118, %v101
    %v120 = vpop.permute.xlu0 %119
    %121 = vset.pattern.permute.xlu0 0
    %122 = vperm.xlu0 %121, %v102
    %v123 = vpop.permute.xlu0 %122
    %124 = vset.pattern.permute.xlu0 0
    %125 = vperm.xlu0 %124, %v103
    %v126 = vpop.permute.xlu0 %125
    %127 = vset.pattern.permute.xlu0 0
    %128 = vperm.xlu0 %127, %v104
    %v129 = vpop.permute.xlu0 %128
    %130 = vset.pattern.permute.xlu0 0
    %131 = vperm.xlu0 %130, %v105
    %v132 = vpop.permute.xlu0 %131
    %vm133 = vcmp.eq.s32.totalorder %v33, %v108
    %vm134 = vcmp.eq.s32.totalorder %v33, %v111
    %vm135 = vcmp.eq.s32.totalorder %v33, %v114
    %vm136 = vcmp.eq.s32.totalorder %v33, %v117
    %vm137 = vcmp.eq.s32.totalorder %v33, %v120
    %vm138 = vcmp.eq.s32.totalorder %v33, %v123
    %vm139 = vcmp.eq.s32.totalorder %v33, %v126
    %vm140 = vcmp.eq.s32.totalorder %v33, %v129
    %vm141 = vcmp.eq.s32.totalorder %v33, %v132
    %v142 = vsel %vm133, 1, 0
    %v143 = vsel %vm134, 1, 0
    %v144 = vsel %vm135, 1, 0
    %v145 = vsel %vm136, 1, 0
    %v146 = vsel %vm137, 1, 0
    %v147 = vsel %vm138, 1, 0
    %v148 = vsel %vm139, 1, 0
    %v149 = vsel %vm140, 1, 0
    %v150 = vsel %vm141, 1, 0
    %v151 = vcvt.s32.f32 %v142
    %v152 = vcvt.s32.f32 %v143
    %v153 = vcvt.s32.f32 %v144
    %v154 = vcvt.s32.f32 %v145
    %v155 = vcvt.s32.f32 %v146
    %v156 = vcvt.s32.f32 %v147
    %v157 = vcvt.s32.f32 %v148
    %v158 = vcvt.s32.f32 %v149
    %v159 = vcvt.s32.f32 %v150
    %v160 = vld [vmem:[%s2] sm:$0xff]
    %v161 = vld [vmem:[%s2 + $0x8] sm:$0xff]
    %vm162 = vcmask 130048
    %v164 = vsel %vm162, %v88, 0
    %v167 = vsel %vm162, %v89, 0
    %v170 = vsel %vm162, %v90, 0
    %v173 = vsel %vm162, %v91, 0
    %v176 = vsel %vm162, %v92, 0
    %v179 = vsel %vm162, %v93, 0
    %v182 = vsel %vm162, %v94, 0
    %v185 = vsel %vm162, %v95, 0
    %v188 = vsel %vm162, %v96, 0
    %190 = vmatprep.subr.mxu0 0.0
    %191 = vmatpush1.msra.mxu0 %v160
    %192 = vmatprep.subr.mxu0 0.0
    %193 = vmatpush1.msra.mxu0 %v161
    %194 = vmatprep.subr.mxu0 0.0
    %195 = vmatpush1.msra.mxu0 0.0
    %196 = vmatprep.subr.mxu0 0.0
    %197 = vmatpush1.msra.mxu0 0.0
    %198 = vmatprep.subr.mxu0 0.0
    %199 = vmatpush1.msra.mxu0 0.0
    %200 = vmatprep.subr.mxu0 0.0
    %201 = vmatpush1.msra.mxu0 0.0
    %202 = vmatprep.subr.mxu0 0.0
    %203 = vmatpush1.msra.mxu0 0.0
    %204 = vmatprep.subr.mxu0 0.0
    %205 = vmatpush1.msra.mxu0 0.0
    %206 = vmatprep.subr.mxu0 0.0
    %207 = vmatpush1.msra.mxu0 0.0
    %208 = vmatprep.subr.mxu0 0.0
    %209 = vmatpush1.msra.mxu0 0.0
    %210 = vmatprep.subr.mxu0 0.0
    %211 = vmatpush1.msra.mxu0 0.0
    %212 = vmatprep.subr.mxu0 0.0
    %213 = vmatpush1.msra.mxu0 0.0
    %214 = vmatprep.subr.mxu0 0.0
    %215 = vmatpush1.msra.mxu0 0.0
    %216 = vmatprep.subr.mxu0 0.0
    %217 = vmatpush1.msra.mxu0 0.0
    %218 = vmatprep.subr.mxu0 0.0
    %219 = vmatpush1.msra.mxu0 0.0
    %220 = vmatprep.subr.mxu0 0.0
    %221 = vmatpush1.msra.mxu0 0.0
    %222 = vmatprep.subr.mxu0 0.0
    %223 = vmatpush1.msra.mxu0 0.0
    %224 = vmatprep.subr.mxu0 0.0
    %225 = vmatpush1.msra.mxu0 0.0
    %226 = vmatprep.subr.mxu0 0.0
    %227 = vmatpush1.msra.mxu0 0.0
    %228 = vmatprep.subr.mxu0 0.0
    %229 = vmatpush1.msra.mxu0 0.0
    %230 = vmatprep.subr.mxu0 0.0
    %231 = vmatpush1.msra.mxu0 0.0
    %232 = vmatprep.subr.mxu0 0.0
    %233 = vmatpush1.msra.mxu0 0.0
    %234 = vmatprep.subr.mxu0 0.0
    %235 = vmatpush1.msra.mxu0 0.0
    %236 = vmatprep.subr.mxu0 0.0
    %237 = vmatpush1.msra.mxu0 0.0
    %238 = vmatprep.subr.mxu0 0.0
    %239 = vmatpush1.msra.mxu0 0.0
    %240 = vmatprep.subr.mxu0 0.0
    %241 = vmatpush1.msra.mxu0 0.0
    %242 = vmatprep.subr.mxu0 0.0
    %243 = vmatpush1.msra.mxu0 0.0
    %244 = vmatprep.subr.mxu0 0.0
    %245 = vmatpush1.msra.mxu0 0.0
    %246 = vmatprep.subr.mxu0 0.0
    %247 = vmatpush1.msra.mxu0 0.0
    %248 = vmatprep.subr.mxu0 0.0
    %249 = vmatpush1.msra.mxu0 0.0
    %250 = vmatprep.subr.mxu0 0.0
    %251 = vmatpush1.msra.mxu0 0.0
    %252 = vmatprep.subr.mxu0 0.0
    %253 = vmatpush1.msra.mxu0 0.0
    %254 = vmatprep.mubr.f32.mxu0 0.0
    %255 = vmatmul.mubr.f32.gmra.mrb[0].mxu0 %v164
    %v256 = vpop.f32.mrb[0].mxu0
    %v257 = vadd.f32 0.0, %v256
    %v258 = vpop.f32.mrb[0].mxu0
    %259 = vmatprep.mubr.f32.mxu0 0.0
    %260 = vmatmul.mubr.f32.gmra.mrb[0].mxu0 %v167
    %v261 = vpop.f32.mrb[0].mxu0
    %v262 = vadd.f32 0.0, %v261
    %v263 = vpop.f32.mrb[0].mxu0
    %264 = vmatprep.mubr.f32.mxu0 0.0
    %265 = vmatmul.mubr.f32.gmra.mrb[0].mxu0 %v170
    %v266 = vpop.f32.mrb[0].mxu0
    %v267 = vadd.f32 0.0, %v266
    %v268 = vpop.f32.mrb[0].mxu0
    %269 = vmatprep.mubr.f32.mxu0 0.0
    %270 = vmatmul.mubr.f32.gmra.mrb[0].mxu0 %v173
    %v271 = vpop.f32.mrb[0].mxu0
    %v272 = vadd.f32 0.0, %v271
    %v273 = vpop.f32.mrb[0].mxu0
    %274 = vmatprep.mubr.f32.mxu0 0.0
    %275 = vmatmul.mubr.f32.gmra.mrb[0].mxu0 %v176
    %v276 = vpop.f32.mrb[0].mxu0
    %v277 = vadd.f32 0.0, %v276
    %v278 = vpop.f32.mrb[0].mxu0
    %279 = vmatprep.mubr.f32.mxu0 0.0
    %280 = vmatmul.mubr.f32.gmra.mrb[0].mxu0 %v179
    %v281 = vpop.f32.mrb[0].mxu0
    %v282 = vadd.f32 0.0, %v281
    %v283 = vpop.f32.mrb[0].mxu0
    %284 = vmatprep.mubr.f32.mxu0 0.0
    %285 = vmatmul.mubr.f32.gmra.mrb[0].mxu0 %v182
    %v286 = vpop.f32.mrb[0].mxu0
    %v287 = vadd.f32 0.0, %v286
    %v288 = vpop.f32.mrb[0].mxu0
    %289 = vmatprep.mubr.f32.mxu0 0.0
    %290 = vmatmul.mubr.f32.gmra.mrb[0].mxu0 %v185
    %v291 = vpop.f32.mrb[0].mxu0
    %v292 = vadd.f32 0.0, %v291
    %v293 = vpop.f32.mrb[0].mxu0
    %294 = vmatprep.mubr.f32.mxu0 0.0
    %295 = vmatmul.mubr.f32.gmra.mrb[0].mxu0 %v188
    %v296 = vpop.f32.mrb[0].mxu0
    %v297 = vadd.f32 0.0, %v296
    %v298 = vpop.f32.mrb[0].mxu0
    %299 = vdwg.mxu0
    %v300 = vmul.f32 %v257, %v151
    %v301 = vmul.f32 %v262, %v152
    %v302 = vmul.f32 %v267, %v153
    %v303 = vmul.f32 %v272, %v154
    %v304 = vmul.f32 %v277, %v155
    %v305 = vmul.f32 %v282, %v156
    %v306 = vmul.f32 %v287, %v157
    %v307 = vmul.f32 %v292, %v158
    %v308 = vmul.f32 %v297, %v159
    %v309 = vsel %vm162, %v300, 0.0
    %310 = vadd.xlane.f32.xlu0 %v309
    %v311 = vpop.xlane.xlu0 %310
    %v312 = vsel %vm162, %v301, 0.0
    %313 = vadd.xlane.f32.xlu0 %v312
    %v314 = vpop.xlane.xlu0 %313
    %v315 = vsel %vm162, %v302, 0.0
    %316 = vadd.xlane.f32.xlu0 %v315
    %v317 = vpop.xlane.xlu0 %316
    %v318 = vsel %vm162, %v303, 0.0
    %319 = vadd.xlane.f32.xlu0 %v318
    %v320 = vpop.xlane.xlu0 %319
    %v321 = vsel %vm162, %v304, 0.0
    %322 = vadd.xlane.f32.xlu0 %v321
    %v323 = vpop.xlane.xlu0 %322
    %v324 = vsel %vm162, %v305, 0.0
    %325 = vadd.xlane.f32.xlu0 %v324
    %v326 = vpop.xlane.xlu0 %325
    %v327 = vsel %vm162, %v306, 0.0
    %328 = vadd.xlane.f32.xlu0 %v327
    %v329 = vpop.xlane.xlu0 %328
    %v330 = vsel %vm162, %v307, 0.0
    %331 = vadd.xlane.f32.xlu0 %v330
    %v332 = vpop.xlane.xlu0 %331
    %vm333 = vcmask 125952
    %v334 = vsel %vm333, %v308, 0.0
    %335 = vadd.xlane.f32.xlu0 %v334
    %v336 = vpop.xlane.xlu0 %335
    %s337 = scalar_lea.vmem %s2, 16
    %v338 = vld [vmem:[%s337] sm:$0xff]
    %v339 = vld [vmem:[%s337 + $0x8] sm:$0xff]
    %340 = vmatprep.subr.mxu0 0.0
    %341 = vmatpush1.msra.mxu0 %v338
    %342 = vmatprep.subr.mxu0 0.0
    %343 = vmatpush1.msra.mxu0 %v339
    %344 = vmatprep.subr.mxu0 0.0
    %345 = vmatpush1.msra.mxu0 0.0
    %346 = vmatprep.subr.mxu0 0.0
    %347 = vmatpush1.msra.mxu0 0.0
    %348 = vmatprep.subr.mxu0 0.0
    %349 = vmatpush1.msra.mxu0 0.0
    %350 = vmatprep.subr.mxu0 0.0
    %351 = vmatpush1.msra.mxu0 0.0
    %352 = vmatprep.subr.mxu0 0.0
    %353 = vmatpush1.msra.mxu0 0.0
    %354 = vmatprep.subr.mxu0 0.0
    %355 = vmatpush1.msra.mxu0 0.0
    %356 = vmatprep.subr.mxu0 0.0
    %357 = vmatpush1.msra.mxu0 0.0
    %358 = vmatprep.subr.mxu0 0.0
    %359 = vmatpush1.msra.mxu0 0.0
    %360 = vmatprep.subr.mxu0 0.0
    %361 = vmatpush1.msra.mxu0 0.0
    %362 = vmatprep.subr.mxu0 0.0
    %363 = vmatpush1.msra.mxu0 0.0
    %364 = vmatprep.subr.mxu0 0.0
    %365 = vmatpush1.msra.mxu0 0.0
    %366 = vmatprep.subr.mxu0 0.0
    %367 = vmatpush1.msra.mxu0 0.0
    %368 = vmatprep.subr.mxu0 0.0
    %369 = vmatpush1.msra.mxu0 0.0
    %370 = vmatprep.subr.mxu0 0.0
    %371 = vmatpush1.msra.mxu0 0.0
    %372 = vmatprep.subr.mxu0 0.0
    %373 = vmatpush1.msra.mxu0 0.0
    %374 = vmatprep.subr.mxu0 0.0
    %375 = vmatpush1.msra.mxu0 0.0
    %376 = vmatprep.subr.mxu0 0.0
    %377 = vmatpush1.msra.mxu0 0.0
    %378 = vmatprep.subr.mxu0 0.0
    %379 = vmatpush1.msra.mxu0 0.0
    %380 = vmatprep.subr.mxu0 0.0
    %381 = vmatpush1.msra.mxu0 0.0
    %382 = vmatprep.subr.mxu0 0.0
    %383 = vmatpush1.msra.mxu0 0.0
    %384 = vmatprep.subr.mxu0 0.0
    %385 = vmatpush1.msra.mxu0 0.0
    %386 = vmatprep.subr.mxu0 0.0
    %387 = vmatpush1.msra.mxu0 0.0
    %388 = vmatprep.subr.mxu0 0.0
    %389 = vmatpush1.msra.mxu0 0.0
    %390 = vmatprep.subr.mxu0 0.0
    %391 = vmatpush1.msra.mxu0 0.0
    %392 = vmatprep.subr.mxu0 0.0
    %393 = vmatpush1.msra.mxu0 0.0
    %394 = vmatprep.subr.mxu0 0.0
    %395 = vmatpush1.msra.mxu0 0.0
    %396 = vmatprep.subr.mxu0 0.0
    %397 = vmatpush1.msra.mxu0 0.0
    %398 = vmatprep.subr.mxu0 0.0
    %399 = vmatpush1.msra.mxu0 0.0
    %400 = vmatprep.subr.mxu0 0.0
    %401 = vmatpush1.msra.mxu0 0.0
    %402 = vmatprep.subr.mxu0 0.0
    %403 = vmatpush1.msra.mxu0 0.0
    %404 = vmatprep.mubr.f32.mxu0 0.0
    %405 = vmatmul.mubr.f32.gmra.mrb[0].mxu0 %v164
    %v406 = vpop.f32.mrb[0].mxu0
    %v407 = vadd.f32 0.0, %v406
    %v408 = vpop.f32.mrb[0].mxu0
    %409 = vmatprep.mubr.f32.mxu0 0.0
    %410 = vmatmul.mubr.f32.gmra.mrb[0].mxu0 %v167
    %v411 = vpop.f32.mrb[0].mxu0
    %v412 = vadd.f32 0.0, %v411
    %v413 = vpop.f32.mrb[0].mxu0
    %414 = vmatprep.mubr.f32.mxu0 0.0
    %415 = vmatmul.mubr.f32.gmra.mrb[0].mxu0 %v170
    %v416 = vpop.f32.mrb[0].mxu0
    %v417 = vadd.f32 0.0, %v416
    %v418 = vpop.f32.mrb[0].mxu0
    %419 = vmatprep.mubr.f32.mxu0 0.0
    %420 = vmatmul.mubr.f32.gmra.mrb[0].mxu0 %v173
    %v421 = vpop.f32.mrb[0].mxu0
    %v422 = vadd.f32 0.0, %v421
    %v423 = vpop.f32.mrb[0].mxu0
    %424 = vmatprep.mubr.f32.mxu0 0.0
    %425 = vmatmul.mubr.f32.gmra.mrb[0].mxu0 %v176
    %v426 = vpop.f32.mrb[0].mxu0
    %v427 = vadd.f32 0.0, %v426
    %v428 = vpop.f32.mrb[0].mxu0
    %429 = vmatprep.mubr.f32.mxu0 0.0
    %430 = vmatmul.mubr.f32.gmra.mrb[0].mxu0 %v179
    %v431 = vpop.f32.mrb[0].mxu0
    %v432 = vadd.f32 0.0, %v431
    %v433 = vpop.f32.mrb[0].mxu0
    %434 = vmatprep.mubr.f32.mxu0 0.0
    %435 = vmatmul.mubr.f32.gmra.mrb[0].mxu0 %v182
    %v436 = vpop.f32.mrb[0].mxu0
    %v437 = vadd.f32 0.0, %v436
    %v438 = vpop.f32.mrb[0].mxu0
    %439 = vmatprep.mubr.f32.mxu0 0.0
    %440 = vmatmul.mubr.f32.gmra.mrb[0].mxu0 %v185
    %v441 = vpop.f32.mrb[0].mxu0
    %v442 = vadd.f32 0.0, %v441
    %v443 = vpop.f32.mrb[0].mxu0
    %444 = vmatprep.mubr.f32.mxu0 0.0
    %445 = vmatmul.mubr.f32.gmra.mrb[0].mxu0 %v188
    %v446 = vpop.f32.mrb[0].mxu0
    %v447 = vadd.f32 0.0, %v446
    %v448 = vpop.f32.mrb[0].mxu0
    %449 = vdwg.mxu0
    %v450 = vmul.f32 %v407, %v151
    %v451 = vmul.f32 %v412, %v152
    %v452 = vmul.f32 %v417, %v153
    %v453 = vmul.f32 %v422, %v154
    %v454 = vmul.f32 %v427, %v155
    %v455 = vmul.f32 %v432, %v156
    %v456 = vmul.f32 %v437, %v157
    %v457 = vmul.f32 %v442, %v158
    %v458 = vmul.f32 %v447, %v159
    %v459 = vsel %vm162, %v450, 0.0
    %460 = vadd.xlane.f32.xlu0 %v459
    %v461 = vpop.xlane.xlu0 %460
    %v462 = vsel %vm162, %v451, 0.0
    %463 = vadd.xlane.f32.xlu0 %v462
    %v464 = vpop.xlane.xlu0 %463
    %v465 = vsel %vm162, %v452, 0.0
    %466 = vadd.xlane.f32.xlu0 %v465
    %v467 = vpop.xlane.xlu0 %466
    %v468 = vsel %vm162, %v453, 0.0
    %469 = vadd.xlane.f32.xlu0 %v468
    %v470 = vpop.xlane.xlu0 %469
    %v471 = vsel %vm162, %v454, 0.0
    %472 = vadd.xlane.f32.xlu0 %v471
    %v473 = vpop.xlane.xlu0 %472
    %v474 = vsel %vm162, %v455, 0.0
    %475 = vadd.xlane.f32.xlu0 %v474
    %v476 = vpop.xlane.xlu0 %475
    %v477 = vsel %vm162, %v456, 0.0
    %478 = vadd.xlane.f32.xlu0 %v477
    %v479 = vpop.xlane.xlu0 %478
    %v480 = vsel %vm162, %v457, 0.0
    %481 = vadd.xlane.f32.xlu0 %v480
    %v482 = vpop.xlane.xlu0 %481
    %v483 = vsel %vm333, %v458, 0.0
    %484 = vadd.xlane.f32.xlu0 %v483
    %v485 = vpop.xlane.xlu0 %484
    %s486 = scalar_lea.vmem %s2, 32
    %v487 = vld [vmem:[%s486] sm:$0xff]
    %v488 = vld [vmem:[%s486 + $0x8] sm:$0xff]
    %489 = vmatprep.subr.mxu0 0.0
    %490 = vmatpush1.msra.mxu0 %v487
    %491 = vmatprep.subr.mxu0 0.0
    %492 = vmatpush1.msra.mxu0 %v488
    %493 = vmatprep.subr.mxu0 0.0
    %494 = vmatpush1.msra.mxu0 0.0
    %495 = vmatprep.subr.mxu0 0.0
    %496 = vmatpush1.msra.mxu0 0.0
    %497 = vmatprep.subr.mxu0 0.0
    %498 = vmatpush1.msra.mxu0 0.0
    %499 = vmatprep.subr.mxu0 0.0
    %500 = vmatpush1.msra.mxu0 0.0
    %501 = vmatprep.subr.mxu0 0.0
    %502 = vmatpush1.msra.mxu0 0.0
    %503 = vmatprep.subr.mxu0 0.0
    %504 = vmatpush1.msra.mxu0 0.0
    %505 = vmatprep.subr.mxu0 0.0
    %506 = vmatpush1.msra.mxu0 0.0
    %507 = vmatprep.subr.mxu0 0.0
    %508 = vmatpush1.msra.mxu0 0.0
    %509 = vmatprep.subr.mxu0 0.0
    %510 = vmatpush1.msra.mxu0 0.0
    %511 = vmatprep.subr.mxu0 0.0
    %512 = vmatpush1.msra.mxu0 0.0
    %513 = vmatprep.subr.mxu0 0.0
    %514 = vmatpush1.msra.mxu0 0.0
    %515 = vmatprep.subr.mxu0 0.0
    %516 = vmatpush1.msra.mxu0 0.0
    %517 = vmatprep.subr.mxu0 0.0
    %518 = vmatpush1.msra.mxu0 0.0
    %519 = vmatprep.subr.mxu0 0.0
    %520 = vmatpush1.msra.mxu0 0.0
    %521 = vmatprep.subr.mxu0 0.0
    %522 = vmatpush1.msra.mxu0 0.0
    %523 = vmatprep.subr.mxu0 0.0
    %524 = vmatpush1.msra.mxu0 0.0
    %525 = vmatprep.subr.mxu0 0.0
    %526 = vmatpush1.msra.mxu0 0.0
    %527 = vmatprep.subr.mxu0 0.0
    %528 = vmatpush1.msra.mxu0 0.0
    %529 = vmatprep.subr.mxu0 0.0
    %530 = vmatpush1.msra.mxu0 0.0
    %531 = vmatprep.subr.mxu0 0.0
    %532 = vmatpush1.msra.mxu0 0.0
    %533 = vmatprep.subr.mxu0 0.0
    %534 = vmatpush1.msra.mxu0 0.0
    %535 = vmatprep.subr.mxu0 0.0
    %536 = vmatpush1.msra.mxu0 0.0
    %537 = vmatprep.subr.mxu0 0.0
    %538 = vmatpush1.msra.mxu0 0.0
    %539 = vmatprep.subr.mxu0 0.0
    %540 = vmatpush1.msra.mxu0 0.0
    %541 = vmatprep.subr.mxu0 0.0
    %542 = vmatpush1.msra.mxu0 0.0
    %543 = vmatprep.subr.mxu0 0.0
    %544 = vmatpush1.msra.mxu0 0.0
    %545 = vmatprep.subr.mxu0 0.0
    %546 = vmatpush1.msra.mxu0 0.0
    %547 = vmatprep.subr.mxu0 0.0
    %548 = vmatpush1.msra.mxu0 0.0
    %549 = vmatprep.subr.mxu0 0.0
    %550 = vmatpush1.msra.mxu0 0.0
    %551 = vmatprep.subr.mxu0 0.0
    %552 = vmatpush1.msra.mxu0 0.0
    %553 = vmatprep.mubr.f32.mxu0 0.0
    %554 = vmatmul.mubr.f32.gmra.mrb[0].mxu0 %v164
    %v555 = vpop.f32.mrb[0].mxu0
    %v556 = vadd.f32 0.0, %v555
    %v557 = vpop.f32.mrb[0].mxu0
    %558 = vmatprep.mubr.f32.mxu0 0.0
    %559 = vmatmul.mubr.f32.gmra.mrb[0].mxu0 %v167
    %v560 = vpop.f32.mrb[0].mxu0
    %v561 = vadd.f32 0.0, %v560
    %v562 = vpop.f32.mrb[0].mxu0
    %563 = vmatprep.mubr.f32.mxu0 0.0
    %564 = vmatmul.mubr.f32.gmra.mrb[0].mxu0 %v170
    %v565 = vpop.f32.mrb[0].mxu0
    %v566 = vadd.f32 0.0, %v565
    %v567 = vpop.f32.mrb[0].mxu0
    %568 = vmatprep.mubr.f32.mxu0 0.0
    %569 = vmatmul.mubr.f32.gmra.mrb[0].mxu0 %v173
    %v570 = vpop.f32.mrb[0].mxu0
    %v571 = vadd.f32 0.0, %v570
    %v572 = vpop.f32.mrb[0].mxu0
    %573 = vmatprep.mubr.f32.mxu0 0.0
    %574 = vmatmul.mubr.f32.gmra.mrb[0].mxu0 %v176
    %v575 = vpop.f32.mrb[0].mxu0
    %v576 = vadd.f32 0.0, %v575
    %v577 = vpop.f32.mrb[0].mxu0
    %578 = vmatprep.mubr.f32.mxu0 0.0
    %579 = vmatmul.mubr.f32.gmra.mrb[0].mxu0 %v179
    %v580 = vpop.f32.mrb[0].mxu0
    %v581 = vadd.f32 0.0, %v580
    %v582 = vpop.f32.mrb[0].mxu0
    %583 = vmatprep.mubr.f32.mxu0 0.0
    %584 = vmatmul.mubr.f32.gmra.mrb[0].mxu0 %v182
    %v585 = vpop.f32.mrb[0].mxu0
    %v586 = vadd.f32 0.0, %v585
    %v587 = vpop.f32.mrb[0].mxu0
    %588 = vmatprep.mubr.f32.mxu0 0.0
    %589 = vmatmul.mubr.f32.gmra.mrb[0].mxu0 %v185
    %v590 = vpop.f32.mrb[0].mxu0
    %v591 = vadd.f32 0.0, %v590
    %v592 = vpop.f32.mrb[0].mxu0
    %593 = vmatprep.mubr.f32.mxu0 0.0
    %594 = vmatmul.mubr.f32.gmra.mrb[0].mxu0 %v188
    %v595 = vpop.f32.mrb[0].mxu0
    %v596 = vadd.f32 0.0, %v595
    %v597 = vpop.f32.mrb[0].mxu0
    %598 = vdwg.mxu0
    %v599 = vmul.f32 %v556, %v151
    %v600 = vmul.f32 %v561, %v152
    %v601 = vmul.f32 %v566, %v153
    %v602 = vmul.f32 %v571, %v154
    %v603 = vmul.f32 %v576, %v155
    %v604 = vmul.f32 %v581, %v156
    %v605 = vmul.f32 %v586, %v157
    %v606 = vmul.f32 %v591, %v158
    %v607 = vmul.f32 %v596, %v159
    %v608 = vsel %vm162, %v599, 0.0
    %609 = vadd.xlane.f32.xlu0 %v608
    %v610 = vpop.xlane.xlu0 %609
    %v611 = vsel %vm162, %v600, 0.0
    %612 = vadd.xlane.f32.xlu0 %v611
    %v613 = vpop.xlane.xlu0 %612
    %v614 = vsel %vm162, %v601, 0.0
    %615 = vadd.xlane.f32.xlu0 %v614
    %v616 = vpop.xlane.xlu0 %615
    %v617 = vsel %vm162, %v602, 0.0
    %618 = vadd.xlane.f32.xlu0 %v617
    %v619 = vpop.xlane.xlu0 %618
    %v620 = vsel %vm162, %v603, 0.0
    %621 = vadd.xlane.f32.xlu0 %v620
    %v622 = vpop.xlane.xlu0 %621
    %v623 = vsel %vm162, %v604, 0.0
    %624 = vadd.xlane.f32.xlu0 %v623
    %v625 = vpop.xlane.xlu0 %624
    %v626 = vsel %vm162, %v605, 0.0
    %627 = vadd.xlane.f32.xlu0 %v626
    %v628 = vpop.xlane.xlu0 %627
    %v629 = vsel %vm162, %v606, 0.0
    %630 = vadd.xlane.f32.xlu0 %v629
    %v631 = vpop.xlane.xlu0 %630
    %v632 = vsel %vm333, %v607, 0.0
    %633 = vadd.xlane.f32.xlu0 %v632
    %v634 = vpop.xlane.xlu0 %633
    %v635 = vld [vmem:[#allocation2] sm:$0xff]
    %v636 = vld [vmem:[#allocation2 + $0x8] sm:$0xff]
    %637 = vmatprep.subr.mxu0 0.0
    %638 = vmatpush1.msra.mxu0 %v635
    %639 = vmatprep.subr.mxu0 0.0
    %640 = vmatpush1.msra.mxu0 %v636
    %641 = vmatprep.subr.mxu0 0.0
    %642 = vmatpush1.msra.mxu0 0.0
    %643 = vmatprep.subr.mxu0 0.0
    %644 = vmatpush1.msra.mxu0 0.0
    %645 = vmatprep.subr.mxu0 0.0
    %646 = vmatpush1.msra.mxu0 0.0
    %647 = vmatprep.subr.mxu0 0.0
    %648 = vmatpush1.msra.mxu0 0.0
    %649 = vmatprep.subr.mxu0 0.0
    %650 = vmatpush1.msra.mxu0 0.0
    %651 = vmatprep.subr.mxu0 0.0
    %652 = vmatpush1.msra.mxu0 0.0
    %653 = vmatprep.subr.mxu0 0.0
    %654 = vmatpush1.msra.mxu0 0.0
    %655 = vmatprep.subr.mxu0 0.0
    %656 = vmatpush1.msra.mxu0 0.0
    %657 = vmatprep.subr.mxu0 0.0
    %658 = vmatpush1.msra.mxu0 0.0
    %659 = vmatprep.subr.mxu0 0.0
    %660 = vmatpush1.msra.mxu0 0.0
    %661 = vmatprep.subr.mxu0 0.0
    %662 = vmatpush1.msra.mxu0 0.0
    %663 = vmatprep.subr.mxu0 0.0
    %664 = vmatpush1.msra.mxu0 0.0
    %665 = vmatprep.subr.mxu0 0.0
    %666 = vmatpush1.msra.mxu0 0.0
    %667 = vmatprep.subr.mxu0 0.0
    %668 = vmatpush1.msra.mxu0 0.0
    %669 = vmatprep.subr.mxu0 0.0
    %670 = vmatpush1.msra.mxu0 0.0
    %671 = vmatprep.subr.mxu0 0.0
    %672 = vmatpush1.msra.mxu0 0.0
    %673 = vmatprep.subr.mxu0 0.0
    %674 = vmatpush1.msra.mxu0 0.0
    %675 = vmatprep.subr.mxu0 0.0
    %676 = vmatpush1.msra.mxu0 0.0
    %677 = vmatprep.subr.mxu0 0.0
    %678 = vmatpush1.msra.mxu0 0.0
    %679 = vmatprep.subr.mxu0 0.0
    %680 = vmatpush1.msra.mxu0 0.0
    %681 = vmatprep.subr.mxu0 0.0
    %682 = vmatpush1.msra.mxu0 0.0
    %683 = vmatprep.subr.mxu0 0.0
    %684 = vmatpush1.msra.mxu0 0.0
    %685 = vmatprep.subr.mxu0 0.0
    %686 = vmatpush1.msra.mxu0 0.0
    %687 = vmatprep.subr.mxu0 0.0
    %688 = vmatpush1.msra.mxu0 0.0
    %689 = vmatprep.subr.mxu0 0.0
    %690 = vmatpush1.msra.mxu0 0.0
    %691 = vmatprep.subr.mxu0 0.0
    %692 = vmatpush1.msra.mxu0 0.0
    %693 = vmatprep.subr.mxu0 0.0
    %694 = vmatpush1.msra.mxu0 0.0
    %695 = vmatprep.subr.mxu0 0.0
    %696 = vmatpush1.msra.mxu0 0.0
    %697 = vmatprep.subr.mxu0 0.0
    %698 = vmatpush1.msra.mxu0 0.0
    %699 = vmatprep.subr.mxu0 0.0
    %700 = vmatpush1.msra.mxu0 0.0
    %701 = vmatprep.mubr.f32.mxu0 0.0
    %702 = vmatmul.mubr.f32.gmra.mrb[0].mxu0 %v164
    %v703 = vpop.f32.mrb[0].mxu0
    %v704 = vadd.f32 0.0, %v703
    %v705 = vpop.f32.mrb[0].mxu0
    %706 = vmatprep.mubr.f32.mxu0 0.0
    %707 = vmatmul.mubr.f32.gmra.mrb[0].mxu0 %v167
    %v708 = vpop.f32.mrb[0].mxu0
    %v709 = vadd.f32 0.0, %v708
    %v710 = vpop.f32.mrb[0].mxu0
    %711 = vmatprep.mubr.f32.mxu0 0.0
    %712 = vmatmul.mubr.f32.gmra.mrb[0].mxu0 %v170
    %v713 = vpop.f32.mrb[0].mxu0
    %v714 = vadd.f32 0.0, %v713
    %v715 = vpop.f32.mrb[0].mxu0
    %716 = vmatprep.mubr.f32.mxu0 0.0
    %717 = vmatmul.mubr.f32.gmra.mrb[0].mxu0 %v173
    %v718 = vpop.f32.mrb[0].mxu0
    %v719 = vadd.f32 0.0, %v718
    %v720 = vpop.f32.mrb[0].mxu0
    %721 = vmatprep.mubr.f32.mxu0 0.0
    %722 = vmatmul.mubr.f32.gmra.mrb[0].mxu0 %v176
    %v723 = vpop.f32.mrb[0].mxu0
    %v724 = vadd.f32 0.0, %v723
    %v725 = vpop.f32.mrb[0].mxu0
    %726 = vmatprep.mubr.f32.mxu0 0.0
    %727 = vmatmul.mubr.f32.gmra.mrb[0].mxu0 %v179
    %v728 = vpop.f32.mrb[0].mxu0
    %v729 = vadd.f32 0.0, %v728
    %v730 = vpop.f32.mrb[0].mxu0
    %731 = vmatprep.mubr.f32.mxu0 0.0
    %732 = vmatmul.mubr.f32.gmra.mrb[0].mxu0 %v182
    %v733 = vpop.f32.mrb[0].mxu0
    %v734 = vadd.f32 0.0, %v733
    %v735 = vpop.f32.mrb[0].mxu0
    %736 = vmatprep.mubr.f32.mxu0 0.0
    %737 = vmatmul.mubr.f32.gmra.mrb[0].mxu0 %v185
    %v738 = vpop.f32.mrb[0].mxu0
    %v739 = vadd.f32 0.0, %v738
    %v740 = vpop.f32.mrb[0].mxu0
    %741 = vmatprep.mubr.f32.mxu0 0.0
    %742 = vmatmul.mubr.f32.gmra.mrb[0].mxu0 %v188
    %v743 = vpop.f32.mrb[0].mxu0
    %v744 = vadd.f32 0.0, %v743
    %v745 = vpop.f32.mrb[0].mxu0
    %746 = vdwg.mxu0
    %v747 = vmul.f32 %v704, %v151
    %v748 = vmul.f32 %v709, %v152
    %v749 = vmul.f32 %v714, %v153
    %v750 = vmul.f32 %v719, %v154
    %v751 = vmul.f32 %v724, %v155
    %v752 = vmul.f32 %v729, %v156
    %v753 = vmul.f32 %v734, %v157
    %v754 = vmul.f32 %v739, %v158
    %v755 = vmul.f32 %v744, %v159
    %v756 = vsel %vm162, %v747, 0.0
    %757 = vadd.xlane.f32.xlu0 %v756
    %v758 = vpop.xlane.xlu0 %757
    %v759 = vsel %vm162, %v748, 0.0
    %760 = vadd.xlane.f32.xlu0 %v759
    %v761 = vpop.xlane.xlu0 %760
    %v762 = vsel %vm162, %v749, 0.0
    %763 = vadd.xlane.f32.xlu0 %v762
    %v764 = vpop.xlane.xlu0 %763
    %v765 = vsel %vm162, %v750, 0.0
    %766 = vadd.xlane.f32.xlu0 %v765
    %v767 = vpop.xlane.xlu0 %766
    %v768 = vsel %vm162, %v751, 0.0
    %769 = vadd.xlane.f32.xlu0 %v768
    %v770 = vpop.xlane.xlu0 %769
    %v771 = vsel %vm162, %v752, 0.0
    %772 = vadd.xlane.f32.xlu0 %v771
    %v773 = vpop.xlane.xlu0 %772
    %v774 = vsel %vm162, %v753, 0.0
    %775 = vadd.xlane.f32.xlu0 %v774
    %v776 = vpop.xlane.xlu0 %775
    %v777 = vsel %vm162, %v754, 0.0
    %778 = vadd.xlane.f32.xlu0 %v777
    %v779 = vpop.xlane.xlu0 %778
    %v780 = vsel %vm333, %v755, 0.0
    %781 = vadd.xlane.f32.xlu0 %v780
    %v782 = vpop.xlane.xlu0 %781
    %s783 = scalar_lea.vmem [#allocation2], 16
    %v784 = vld [vmem:[%s783] sm:$0xff]
    %v785 = vld [vmem:[%s783 + $0x8] sm:$0xff]
    %786 = vmatprep.subr.mxu0 0.0
    %787 = vmatpush1.msra.mxu0 %v784
    %788 = vmatprep.subr.mxu0 0.0
    %789 = vmatpush1.msra.mxu0 %v785
    %790 = vmatprep.subr.mxu0 0.0
    %791 = vmatpush1.msra.mxu0 0.0
    %792 = vmatprep.subr.mxu0 0.0
    %793 = vmatpush1.msra.mxu0 0.0
    %794 = vmatprep.subr.mxu0 0.0
    %795 = vmatpush1.msra.mxu0 0.0
    %796 = vmatprep.subr.mxu0 0.0
    %797 = vmatpush1.msra.mxu0 0.0
    %798 = vmatprep.subr.mxu0 0.0
    %799 = vmatpush1.msra.mxu0 0.0
    %800 = vmatprep.subr.mxu0 0.0
    %801 = vmatpush1.msra.mxu0 0.0
    %802 = vmatprep.subr.mxu0 0.0
    %803 = vmatpush1.msra.mxu0 0.0
    %804 = vmatprep.subr.mxu0 0.0
    %805 = vmatpush1.msra.mxu0 0.0
    %806 = vmatprep.subr.mxu0 0.0
    %807 = vmatpush1.msra.mxu0 0.0
    %808 = vmatprep.subr.mxu0 0.0
    %809 = vmatpush1.msra.mxu0 0.0
    %810 = vmatprep.subr.mxu0 0.0
    %811 = vmatpush1.msra.mxu0 0.0
    %812 = vmatprep.subr.mxu0 0.0
    %813 = vmatpush1.msra.mxu0 0.0
    %814 = vmatprep.subr.mxu0 0.0
    %815 = vmatpush1.msra.mxu0 0.0
    %816 = vmatprep.subr.mxu0 0.0
    %817 = vmatpush1.msra.mxu0 0.0
    %818 = vmatprep.subr.mxu0 0.0
    %819 = vmatpush1.msra.mxu0 0.0
    %820 = vmatprep.subr.mxu0 0.0
    %821 = vmatpush1.msra.mxu0 0.0
    %822 = vmatprep.subr.mxu0 0.0
    %823 = vmatpush1.msra.mxu0 0.0
    %824 = vmatprep.subr.mxu0 0.0
    %825 = vmatpush1.msra.mxu0 0.0
    %826 = vmatprep.subr.mxu0 0.0
    %827 = vmatpush1.msra.mxu0 0.0
    %828 = vmatprep.subr.mxu0 0.0
    %829 = vmatpush1.msra.mxu0 0.0
    %830 = vmatprep.subr.mxu0 0.0
    %831 = vmatpush1.msra.mxu0 0.0
    %832 = vmatprep.subr.mxu0 0.0
    %833 = vmatpush1.msra.mxu0 0.0
    %834 = vmatprep.subr.mxu0 0.0
    %835 = vmatpush1.msra.mxu0 0.0
    %836 = vmatprep.subr.mxu0 0.0
    %837 = vmatpush1.msra.mxu0 0.0
    %838 = vmatprep.subr.mxu0 0.0
    %839 = vmatpush1.msra.mxu0 0.0
    %840 = vmatprep.subr.mxu0 0.0
    %841 = vmatpush1.msra.mxu0 0.0
    %842 = vmatprep.subr.mxu0 0.0
    %843 = vmatpush1.msra.mxu0 0.0
    %844 = vmatprep.subr.mxu0 0.0
    %845 = vmatpush1.msra.mxu0 0.0
    %846 = vmatprep.subr.mxu0 0.0
    %847 = vmatpush1.msra.mxu0 0.0
    %848 = vmatprep.subr.mxu0 0.0
    %849 = vmatpush1.msra.mxu0 0.0
    %850 = vmatprep.mubr.f32.mxu0 0.0
    %851 = vmatmul.mubr.f32.gmra.mrb[0].mxu0 %v164
    %v852 = vpop.f32.mrb[0].mxu0
    %v853 = vadd.f32 0.0, %v852
    %v854 = vpop.f32.mrb[0].mxu0
    %855 = vmatprep.mubr.f32.mxu0 0.0
    %856 = vmatmul.mubr.f32.gmra.mrb[0].mxu0 %v167
    %v857 = vpop.f32.mrb[0].mxu0
    %v858 = vadd.f32 0.0, %v857
    %v859 = vpop.f32.mrb[0].mxu0
    %860 = vmatprep.mubr.f32.mxu0 0.0
    %861 = vmatmul.mubr.f32.gmra.mrb[0].mxu0 %v170
    %v862 = vpop.f32.mrb[0].mxu0
    %v863 = vadd.f32 0.0, %v862
    %v864 = vpop.f32.mrb[0].mxu0
    %865 = vmatprep.mubr.f32.mxu0 0.0
    %866 = vmatmul.mubr.f32.gmra.mrb[0].mxu0 %v173
    %v867 = vpop.f32.mrb[0].mxu0
    %v868 = vadd.f32 0.0, %v867
    %v869 = vpop.f32.mrb[0].mxu0
    %870 = vmatprep.mubr.f32.mxu0 0.0
    %871 = vmatmul.mubr.f32.gmra.mrb[0].mxu0 %v176
    %v872 = vpop.f32.mrb[0].mxu0
    %v873 = vadd.f32 0.0, %v872
    %v874 = vpop.f32.mrb[0].mxu0
    %875 = vmatprep.mubr.f32.mxu0 0.0
    %876 = vmatmul.mubr.f32.gmra.mrb[0].mxu0 %v179
    %v877 = vpop.f32.mrb[0].mxu0
    %v878 = vadd.f32 0.0, %v877
    %v879 = vpop.f32.mrb[0].mxu0
    %880 = vmatprep.mubr.f32.mxu0 0.0
    %881 = vmatmul.mubr.f32.gmra.mrb[0].mxu0 %v182
    %v882 = vpop.f32.mrb[0].mxu0
    %v883 = vadd.f32 0.0, %v882
    %v884 = vpop.f32.mrb[0].mxu0
    %885 = vmatprep.mubr.f32.mxu0 0.0
    %886 = vmatmul.mubr.f32.gmra.mrb[0].mxu0 %v185
    %v887 = vpop.f32.mrb[0].mxu0
    %v888 = vadd.f32 0.0, %v887
    %v889 = vpop.f32.mrb[0].mxu0
    %890 = vmatprep.mubr.f32.mxu0 0.0
    %891 = vmatmul.mubr.f32.gmra.mrb[0].mxu0 %v188
    %v892 = vpop.f32.mrb[0].mxu0
    %v893 = vadd.f32 0.0, %v892
    %v894 = vpop.f32.mrb[0].mxu0
    %895 = vdwg.mxu0
    %v896 = vmul.f32 %v853, %v151
    %v897 = vmul.f32 %v858, %v152
    %v898 = vmul.f32 %v863, %v153
    %v899 = vmul.f32 %v868, %v154
    %v900 = vmul.f32 %v873, %v155
    %v901 = vmul.f32 %v878, %v156
    %v902 = vmul.f32 %v883, %v157
    %v903 = vmul.f32 %v888, %v158
    %v904 = vmul.f32 %v893, %v159
    %v905 = vsel %vm162, %v896, 0.0
    %906 = vadd.xlane.f32.xlu0 %v905
    %v907 = vpop.xlane.xlu0 %906
    %v908 = vsel %vm162, %v897, 0.0
    %909 = vadd.xlane.f32.xlu0 %v908
    %v910 = vpop.xlane.xlu0 %909
    %v911 = vsel %vm162, %v898, 0.0
    %912 = vadd.xlane.f32.xlu0 %v911
    %v913 = vpop.xlane.xlu0 %912
    %v914 = vsel %vm162, %v899, 0.0
    %915 = vadd.xlane.f32.xlu0 %v914
    %v916 = vpop.xlane.xlu0 %915
    %v917 = vsel %vm162, %v900, 0.0
    %918 = vadd.xlane.f32.xlu0 %v917
    %v919 = vpop.xlane.xlu0 %918
    %v920 = vsel %vm162, %v901, 0.0
    %921 = vadd.xlane.f32.xlu0 %v920
    %v922 = vpop.xlane.xlu0 %921
    %v923 = vsel %vm162, %v902, 0.0
    %924 = vadd.xlane.f32.xlu0 %v923
    %v925 = vpop.xlane.xlu0 %924
    %v926 = vsel %vm162, %v903, 0.0
    %927 = vadd.xlane.f32.xlu0 %v926
    %v928 = vpop.xlane.xlu0 %927
    %v929 = vsel %vm333, %v904, 0.0
    %930 = vadd.xlane.f32.xlu0 %v929
    %v931 = vpop.xlane.xlu0 %930
    %s932 = scalar_lea.vmem [#allocation2], 32
    %v933 = vld [vmem:[%s932] sm:$0xff]
    %v934 = vld [vmem:[%s932 + $0x8] sm:$0xff]
    %935 = vmatprep.subr.mxu0 0.0
    %936 = vmatpush1.msra.mxu0 %v933
    %937 = vmatprep.subr.mxu0 0.0
    %938 = vmatpush1.msra.mxu0 %v934
    %939 = vmatprep.subr.mxu0 0.0
    %940 = vmatpush1.msra.mxu0 0.0
    %941 = vmatprep.subr.mxu0 0.0
    %942 = vmatpush1.msra.mxu0 0.0
    %943 = vmatprep.subr.mxu0 0.0
    %944 = vmatpush1.msra.mxu0 0.0
    %945 = vmatprep.subr.mxu0 0.0
    %946 = vmatpush1.msra.mxu0 0.0
    %947 = vmatprep.subr.mxu0 0.0
    %948 = vmatpush1.msra.mxu0 0.0
    %949 = vmatprep.subr.mxu0 0.0
    %950 = vmatpush1.msra.mxu0 0.0
    %951 = vmatprep.subr.mxu0 0.0
    %952 = vmatpush1.msra.mxu0 0.0
    %953 = vmatprep.subr.mxu0 0.0
    %954 = vmatpush1.msra.mxu0 0.0
    %955 = vmatprep.subr.mxu0 0.0
    %956 = vmatpush1.msra.mxu0 0.0
    %957 = vmatprep.subr.mxu0 0.0
    %958 = vmatpush1.msra.mxu0 0.0
    %959 = vmatprep.subr.mxu0 0.0
    %960 = vmatpush1.msra.mxu0 0.0
    %961 = vmatprep.subr.mxu0 0.0
    %962 = vmatpush1.msra.mxu0 0.0
    %963 = vmatprep.subr.mxu0 0.0
    %964 = vmatpush1.msra.mxu0 0.0
    %965 = vmatprep.subr.mxu0 0.0
    %966 = vmatpush1.msra.mxu0 0.0
    %967 = vmatprep.subr.mxu0 0.0
    %968 = vmatpush1.msra.mxu0 0.0
    %969 = vmatprep.subr.mxu0 0.0
    %970 = vmatpush1.msra.mxu0 0.0
    %971 = vmatprep.subr.mxu0 0.0
    %972 = vmatpush1.msra.mxu0 0.0
    %973 = vmatprep.subr.mxu0 0.0
    %974 = vmatpush1.msra.mxu0 0.0
    %975 = vmatprep.subr.mxu0 0.0
    %976 = vmatpush1.msra.mxu0 0.0
    %977 = vmatprep.subr.mxu0 0.0
    %978 = vmatpush1.msra.mxu0 0.0
    %979 = vmatprep.subr.mxu0 0.0
    %980 = vmatpush1.msra.mxu0 0.0
    %981 = vmatprep.subr.mxu0 0.0
    %982 = vmatpush1.msra.mxu0 0.0
    %983 = vmatprep.subr.mxu0 0.0
    %984 = vmatpush1.msra.mxu0 0.0
    %985 = vmatprep.subr.mxu0 0.0
    %986 = vmatpush1.msra.mxu0 0.0
    %987 = vmatprep.subr.mxu0 0.0
    %988 = vmatpush1.msra.mxu0 0.0
    %989 = vmatprep.subr.mxu0 0.0
    %990 = vmatpush1.msra.mxu0 0.0
    %991 = vmatprep.subr.mxu0 0.0
    %992 = vmatpush1.msra.mxu0 0.0
    %993 = vmatprep.subr.mxu0 0.0
    %994 = vmatpush1.msra.mxu0 0.0
    %995 = vmatprep.subr.mxu0 0.0
    %996 = vmatpush1.msra.mxu0 0.0
    %997 = vmatprep.subr.mxu0 0.0
    %998 = vmatpush1.msra.mxu0 0.0
    %999 = vmatprep.mubr.f32.mxu0 0.0
    %1000 = vmatmul.mubr.f32.gmra.mrb[0].mxu0 %v164
    %v1001 = vpop.f32.mrb[0].mxu0
    %v1002 = vadd.f32 0.0, %v1001
    %v1003 = vpop.f32.mrb[0].mxu0
    %1004 = vmatprep.mubr.f32.mxu0 0.0
    %1005 = vmatmul.mubr.f32.gmra.mrb[0].mxu0 %v167
    %v1006 = vpop.f32.mrb[0].mxu0
    %v1007 = vadd.f32 0.0, %v1006
    %v1008 = vpop.f32.mrb[0].mxu0
    %1009 = vmatprep.mubr.f32.mxu0 0.0
    %1010 = vmatmul.mubr.f32.gmra.mrb[0].mxu0 %v170
    %v1011 = vpop.f32.mrb[0].mxu0
    %v1012 = vadd.f32 0.0, %v1011
    %v1013 = vpop.f32.mrb[0].mxu0
    %1014 = vmatprep.mubr.f32.mxu0 0.0
    %1015 = vmatmul.mubr.f32.gmra.mrb[0].mxu0 %v173
    %v1016 = vpop.f32.mrb[0].mxu0
    %v1017 = vadd.f32 0.0, %v1016
    %v1018 = vpop.f32.mrb[0].mxu0
    %1019 = vmatprep.mubr.f32.mxu0 0.0
    %1020 = vmatmul.mubr.f32.gmra.mrb[0].mxu0 %v176
    %v1021 = vpop.f32.mrb[0].mxu0
    %v1022 = vadd.f32 0.0, %v1021
    %v1023 = vpop.f32.mrb[0].mxu0
    %1024 = vmatprep.mubr.f32.mxu0 0.0
    %1025 = vmatmul.mubr.f32.gmra.mrb[0].mxu0 %v179
    %v1026 = vpop.f32.mrb[0].mxu0
    %v1027 = vadd.f32 0.0, %v1026
    %v1028 = vpop.f32.mrb[0].mxu0
    %1029 = vmatprep.mubr.f32.mxu0 0.0
    %1030 = vmatmul.mubr.f32.gmra.mrb[0].mxu0 %v182
    %v1031 = vpop.f32.mrb[0].mxu0
    %v1032 = vadd.f32 0.0, %v1031
    %v1033 = vpop.f32.mrb[0].mxu0
    %1034 = vmatprep.mubr.f32.mxu0 0.0
    %1035 = vmatmul.mubr.f32.gmra.mrb[0].mxu0 %v185
    %v1036 = vpop.f32.mrb[0].mxu0
    %v1037 = vadd.f32 0.0, %v1036
    %v1038 = vpop.f32.mrb[0].mxu0
    %1039 = vmatprep.mubr.f32.mxu0 0.0
    %1040 = vmatmul.mubr.f32.gmra.mrb[0].mxu0 %v188
    %v1041 = vpop.f32.mrb[0].mxu0
    %v1042 = vadd.f32 0.0, %v1041
    %v1043 = vpop.f32.mrb[0].mxu0
    %1044 = vdwg.mxu0
    %v1045 = vmul.f32 %v1002, %v151
    %v1046 = vmul.f32 %v1007, %v152
    %v1047 = vmul.f32 %v1012, %v153
    %v1048 = vmul.f32 %v1017, %v154
    %v1049 = vmul.f32 %v1022, %v155
    %v1050 = vmul.f32 %v1027, %v156
    %v1051 = vmul.f32 %v1032, %v157
    %v1052 = vmul.f32 %v1037, %v158
    %v1053 = vmul.f32 %v1042, %v159
    %v1054 = vsel %vm162, %v1045, 0.0
    %1055 = vadd.xlane.f32.xlu0 %v1054
    %v1056 = vpop.xlane.xlu0 %1055
    %v1057 = vsel %vm162, %v1046, 0.0
    %1058 = vadd.xlane.f32.xlu0 %v1057
    %v1059 = vpop.xlane.xlu0 %1058
    %v1060 = vsel %vm162, %v1047, 0.0
    %1061 = vadd.xlane.f32.xlu0 %v1060
    %v1062 = vpop.xlane.xlu0 %1061
    %v1063 = vsel %vm162, %v1048, 0.0
    %1064 = vadd.xlane.f32.xlu0 %v1063
    %v1065 = vpop.xlane.xlu0 %1064
    %v1066 = vsel %vm162, %v1049, 0.0
    %1067 = vadd.xlane.f32.xlu0 %v1066
    %v1068 = vpop.xlane.xlu0 %1067
    %v1069 = vsel %vm162, %v1050, 0.0
    %1070 = vadd.xlane.f32.xlu0 %v1069
    %v1071 = vpop.xlane.xlu0 %1070
    %v1072 = vsel %vm162, %v1051, 0.0
    %1073 = vadd.xlane.f32.xlu0 %v1072
    %v1074 = vpop.xlane.xlu0 %1073
    %v1075 = vsel %vm162, %v1052, 0.0
    %1076 = vadd.xlane.f32.xlu0 %v1075
    %v1077 = vpop.xlane.xlu0 %1076
    %v1078 = vsel %vm333, %v1053, 0.0
    %1079 = vadd.xlane.f32.xlu0 %v1078
    %v1080 = vpop.xlane.xlu0 %1079
    %v1081 = vsub.f32 %v758, %v311
    %v1082 = vsub.f32 %v761, %v314
    %v1083 = vsub.f32 %v764, %v317
    %v1084 = vsub.f32 %v767, %v320
    %v1085 = vsub.f32 %v770, %v323
    %v1086 = vsub.f32 %v773, %v326
    %v1087 = vsub.f32 %v776, %v329
    %v1088 = vsub.f32 %v779, %v332
    %v1089 = vsub.f32 %v782, %v336
    %v1090 = vsub.f32 %v907, %v461
    %v1091 = vsub.f32 %v910, %v464
    %v1092 = vsub.f32 %v913, %v467
    %v1093 = vsub.f32 %v916, %v470
    %v1094 = vsub.f32 %v919, %v473
    %v1095 = vsub.f32 %v922, %v476
    %v1096 = vsub.f32 %v925, %v479
    %v1097 = vsub.f32 %v928, %v482
    %v1098 = vsub.f32 %v931, %v485
    %v1099 = vsub.f32 %v1056, %v610
    %v1100 = vsub.f32 %v1059, %v613
    %v1101 = vsub.f32 %v1062, %v616
    %v1102 = vsub.f32 %v1065, %v619
    %v1103 = vsub.f32 %v1068, %v622
    %v1104 = vsub.f32 %v1071, %v625
    %v1105 = vsub.f32 %v1074, %v628
    %v1106 = vsub.f32 %v1077, %v631
    %v1107 = vsub.f32 %v1080, %v634
    %vm1108 = vcmask 7168
    %v1109 = vsel %vm1108, %v1099, 0.0
    %v1110 = vsel %vm1108, %v1100, 0.0
    %v1111 = vadd.f32 %v1109, %v1110
    %v1112 = vsel %vm1108, %v1101, 0.0
    %v1113 = vadd.f32 %v1111, %v1112
    %v1114 = vsel %vm1108, %v1102, 0.0
    %v1115 = vadd.f32 %v1113, %v1114
    %v1116 = vsel %vm1108, %v1103, 0.0
    %v1117 = vadd.f32 %v1115, %v1116
    %v1118 = vsel %vm1108, %v1104, 0.0
    %v1119 = vadd.f32 %v1117, %v1118
    %v1120 = vsel %vm1108, %v1105, 0.0
    %v1121 = vadd.f32 %v1119, %v1120
    %v1122 = vsel %vm1108, %v1106, 0.0
    %v1123 = vadd.f32 %v1121, %v1122
    %vm1124 = vcmask 3072
    %v1125 = vsel %vm1124, %v1107, 0.0
    %v1126 = vadd.f32 %v1123, %v1125
    %1127 = vadd.xlane.f32.xlu0 %v1126
    %v1128 = vpop.xlane.xlu0 %1127
    %v1129 = vrot.slane %v1128, 4
    %v1130 = vadd.f32 %v1128, %v1129
    %v1131 = vrot.slane %v1130, 2
    %v1132 = vadd.f32 %v1130, %v1131
    %v1133 = vrot.slane %v1132, 1
    %v1134 = vadd.f32 %v1132, %v1133
    %s1135 = vtos %v1134
    %v1136 = vrcp.pop 68.0
    %s1137 = vtos %v1136
    %s1138 = smul.f32 %s1135, %s1137
    %v1139 = vstv %s1138
    %v1140 = vsub.f32 %v1099, %v1139
    %v1141 = vsub.f32 %v1100, %v1139
    %v1142 = vsub.f32 %v1101, %v1139
    %v1143 = vsub.f32 %v1102, %v1139
    %v1144 = vsub.f32 %v1103, %v1139
    %v1145 = vsub.f32 %v1104, %v1139
    %v1146 = vsub.f32 %v1105, %v1139
    %v1147 = vsub.f32 %v1106, %v1139
    %v1148 = vsub.f32 %v1107, %v1139
    %v1149 = vmul.f32 %v1081, %v1081
    %v1150 = vmul.f32 %v1082, %v1082
    %v1151 = vmul.f32 %v1083, %v1083
    %v1152 = vmul.f32 %v1084, %v1084
    %v1153 = vmul.f32 %v1085, %v1085
    %v1154 = vmul.f32 %v1086, %v1086
    %v1155 = vmul.f32 %v1087, %v1087
    %v1156 = vmul.f32 %v1088, %v1088
    %v1157 = vmul.f32 %v1089, %v1089
    %v1158 = vmul.f32 %v1090, %v1090
    %v1159 = vmul.f32 %v1091, %v1091
    %v1160 = vmul.f32 %v1092, %v1092
    %v1161 = vmul.f32 %v1093, %v1093
    %v1162 = vmul.f32 %v1094, %v1094
    %v1163 = vmul.f32 %v1095, %v1095
    %v1164 = vmul.f32 %v1096, %v1096
    %v1165 = vmul.f32 %v1097, %v1097
    %v1166 = vmul.f32 %v1098, %v1098
    %v1167 = vadd.f32 %v1149, %v1158
    %v1168 = vadd.f32 %v1150, %v1159
    %v1169 = vadd.f32 %v1151, %v1160
    %v1170 = vadd.f32 %v1152, %v1161
    %v1171 = vadd.f32 %v1153, %v1162
    %v1172 = vadd.f32 %v1154, %v1163
    %v1173 = vadd.f32 %v1155, %v1164
    %v1174 = vadd.f32 %v1156, %v1165
    %v1175 = vadd.f32 %v1157, %v1166
    %v1176 = vmul.f32 %v1140, %v1140
    %v1177 = vmul.f32 %v1141, %v1141
    %v1178 = vmul.f32 %v1142, %v1142
    %v1179 = vmul.f32 %v1143, %v1143
    %v1180 = vmul.f32 %v1144, %v1144
    %v1181 = vmul.f32 %v1145, %v1145
    %v1182 = vmul.f32 %v1146, %v1146
    %v1183 = vmul.f32 %v1147, %v1147
    %v1184 = vmul.f32 %v1148, %v1148
    %v1185 = vadd.f32 %v1167, %v1176
    %v1186 = vadd.f32 %v1168, %v1177
    %v1187 = vadd.f32 %v1169, %v1178
    %v1188 = vadd.f32 %v1170, %v1179
    %v1189 = vadd.f32 %v1171, %v1180
    %v1190 = vadd.f32 %v1172, %v1181
    %v1191 = vadd.f32 %v1173, %v1182
    %v1192 = vadd.f32 %v1174, %v1183
    %v1193 = vadd.f32 %v1175, %v1184
    %v1194 = vrsqrt.pop %v1185
    %v1195 = vmul.f32 %v1185, %v1194
    %vm1196 = vcmp.eq.f32.partialorder %v1185, inf
    %v1197 = vsel %vm1196, %v1185, %v1195
    %vm1198 = vcmp.eq.f32.partialorder %v1185, 0.0
    %v1199 = vand.u32 %v1185, 2147483648
    %v1200 = vsel %vm1198, %v1199, %v1197
    %v1201 = vrsqrt.pop %v1186
    %v1202 = vmul.f32 %v1186, %v1201
    %vm1203 = vcmp.eq.f32.partialorder %v1186, inf
    %v1204 = vsel %vm1203, %v1186, %v1202
    %vm1205 = vcmp.eq.f32.partialorder %v1186, 0.0
    %v1206 = vand.u32 %v1186, 2147483648
    %v1207 = vsel %vm1205, %v1206, %v1204
    %v1208 = vrsqrt.pop %v1187
    %v1209 = vmul.f32 %v1187, %v1208
    %vm1210 = vcmp.eq.f32.partialorder %v1187, inf
    %v1211 = vsel %vm1210, %v1187, %v1209
    %vm1212 = vcmp.eq.f32.partialorder %v1187, 0.0
    %v1213 = vand.u32 %v1187, 2147483648
    %v1214 = vsel %vm1212, %v1213, %v1211
    %v1215 = vrsqrt.pop %v1188
    %v1216 = vmul.f32 %v1188, %v1215
    %vm1217 = vcmp.eq.f32.partialorder %v1188, inf
    %v1218 = vsel %vm1217, %v1188, %v1216
    %vm1219 = vcmp.eq.f32.partialorder %v1188, 0.0
    %v1220 = vand.u32 %v1188, 2147483648
    %v1221 = vsel %vm1219, %v1220, %v1218
    %v1222 = vrsqrt.pop %v1189
    %v1223 = vmul.f32 %v1189, %v1222
    %vm1224 = vcmp.eq.f32.partialorder %v1189, inf
    %v1225 = vsel %vm1224, %v1189, %v1223
    %vm1226 = vcmp.eq.f32.partialorder %v1189, 0.0
    %v1227 = vand.u32 %v1189, 2147483648
    %v1228 = vsel %vm1226, %v1227, %v1225
    %v1229 = vrsqrt.pop %v1190
    %v1230 = vmul.f32 %v1190, %v1229
    %vm1231 = vcmp.eq.f32.partialorder %v1190, inf
    %v1232 = vsel %vm1231, %v1190, %v1230
    %vm1233 = vcmp.eq.f32.partialorder %v1190, 0.0
    %v1234 = vand.u32 %v1190, 2147483648
    %v1235 = vsel %vm1233, %v1234, %v1232
    %v1236 = vrsqrt.pop %v1191
    %v1237 = vmul.f32 %v1191, %v1236
    %vm1238 = vcmp.eq.f32.partialorder %v1191, inf
    %v1239 = vsel %vm1238, %v1191, %v1237
    %vm1240 = vcmp.eq.f32.partialorder %v1191, 0.0
    %v1241 = vand.u32 %v1191, 2147483648
    %v1242 = vsel %vm1240, %v1241, %v1239
    %v1243 = vrsqrt.pop %v1192
    %v1244 = vmul.f32 %v1192, %v1243
    %vm1245 = vcmp.eq.f32.partialorder %v1192, inf
    %v1246 = vsel %vm1245, %v1192, %v1244
    %vm1247 = vcmp.eq.f32.partialorder %v1192, 0.0
    %v1248 = vand.u32 %v1192, 2147483648
    %v1249 = vsel %vm1247, %v1248, %v1246
    %v1250 = vrsqrt.pop %v1193
    %v1251 = vmul.f32 %v1193, %v1250
    %vm1252 = vcmp.eq.f32.partialorder %v1193, inf
    %v1253 = vsel %vm1252, %v1193, %v1251
    %vm1254 = vcmp.eq.f32.partialorder %v1193, 0.0
    %v1255 = vand.u32 %v1193, 2147483648
    %v1256 = vsel %vm1254, %v1255, %v1253
    %v1257 = vsel %vm1108, %v1200, 0.0
    %v1258 = vsel %vm1108, %v1207, 0.0
    %v1259 = vadd.f32 %v1257, %v1258
    %v1260 = vsel %vm1108, %v1214, 0.0
    %v1261 = vadd.f32 %v1259, %v1260
    %v1262 = vsel %vm1108, %v1221, 0.0
    %v1263 = vadd.f32 %v1261, %v1262
    %v1264 = vsel %vm1108, %v1228, 0.0
    %v1265 = vadd.f32 %v1263, %v1264
    %v1266 = vsel %vm1108, %v1235, 0.0
    %v1267 = vadd.f32 %v1265, %v1266
    %v1268 = vsel %vm1108, %v1242, 0.0
    %v1269 = vadd.f32 %v1267, %v1268
    %v1270 = vsel %vm1108, %v1249, 0.0
    %v1271 = vadd.f32 %v1269, %v1270
    %v1272 = vsel %vm1124, %v1256, 0.0
    %v1273 = vadd.f32 %v1271, %v1272
    %1274 = vadd.xlane.f32.xlu0 %v1273
    %v1275 = vpop.xlane.xlu0 %1274
    %v1276 = vrot.slane %v1275, 4
    %v1277 = vadd.f32 %v1275, %v1276
    %v1278 = vrot.slane %v1277, 2
    %v1279 = vadd.f32 %v1277, %v1278
    %v1280 = vrot.slane %v1279, 1
    %v1281 = vadd.f32 %v1279, %v1280
    %s1282 = vtos %v1281
    %s1283 = smul.f32 %s1282, 0.014705882
    %v1284 = vmax.f32 %v311, %v323
    %v1285 = vmax.f32 %v314, %v326
    %v1286 = vmax.f32 %v317, %v329
    %v1287 = vmax.f32 %v320, %v332
    %vm1288 = vcmask 1043456
    %v1289 = vsel %vm1288, %v336, -inf
    %v1290 = vmax.f32 %v1284, %v1289
    %v1291 = vmax.f32 %v1290, %v1285
    %v1292 = vmax.f32 %v1286, %v1287
    %v1293 = vmax.f32 %v1291, %v1292
    %v1294 = vrot.slane %v1293, 4
    %v1295 = vmax.f32 %v1293, %v1294
    %v1296 = vrot.slane %v1295, 2
    %v1297 = vmax.f32 %v1295, %v1296
    %v1298 = vrot.slane %v1297, 1
    %v1299 = vmax.f32 %v1297, %v1298
    %s1300 = vtos %v1299
    %v1301 = vmin.f32 %v311, %v323
    %v1302 = vmin.f32 %v314, %v326
    %v1303 = vmin.f32 %v317, %v329
    %v1304 = vmin.f32 %v320, %v332
    %v1305 = vsel %vm1288, %v336, inf
    %v1306 = vmin.f32 %v1301, %v1305
    %v1307 = vmin.f32 %v1306, %v1302
    %v1308 = vmin.f32 %v1303, %v1304
    %v1309 = vmin.f32 %v1307, %v1308
    %v1310 = vrot.slane %v1309, 4
    %v1311 = vmin.f32 %v1309, %v1310
    %v1312 = vrot.slane %v1311, 2
    %v1313 = vmin.f32 %v1311, %v1312
    %v1314 = vrot.slane %v1313, 1
    %v1315 = vmin.f32 %v1313, %v1314
    %s1316 = vtos %v1315
    %s1317 = ssub.f32 %s1300, %s1316
    %v1318 = vmax.f32 %v461, %v473
    %v1319 = vmax.f32 %v464, %v476
    %v1320 = vmax.f32 %v467, %v479
    %v1321 = vmax.f32 %v470, %v482
    %v1322 = vsel %vm1288, %v485, -inf
    %v1323 = vmax.f32 %v1318, %v1322
    %v1324 = vmax.f32 %v1323, %v1319
    %v1325 = vmax.f32 %v1320, %v1321
    %v1326 = vmax.f32 %v1324, %v1325
    %v1327 = vrot.slane %v1326, 4
    %v1328 = vmax.f32 %v1326, %v1327
    %v1329 = vrot.slane %v1328, 2
    %v1330 = vmax.f32 %v1328, %v1329
    %v1331 = vrot.slane %v1330, 1
    %v1332 = vmax.f32 %v1330, %v1331
    %s1333 = vtos %v1332
    %v1334 = vmin.f32 %v461, %v473
    %v1335 = vmin.f32 %v464, %v476
    %v1336 = vmin.f32 %v467, %v479
    %v1337 = vmin.f32 %v470, %v482
    %v1338 = vsel %vm1288, %v485, inf
    %v1339 = vmin.f32 %v1334, %v1338
    %v1340 = vmin.f32 %v1339, %v1335
    %v1341 = vmin.f32 %v1336, %v1337
    %v1342 = vmin.f32 %v1340, %v1341
    %v1343 = vrot.slane %v1342, 4
    %v1344 = vmin.f32 %v1342, %v1343
    %v1345 = vrot.slane %v1344, 2
    %v1346 = vmin.f32 %v1344, %v1345
    %v1347 = vrot.slane %v1346, 1
    %v1348 = vmin.f32 %v1346, %v1347
    %s1349 = vtos %v1348
    %s1350 = ssub.f32 %s1333, %s1349
    %s1351 = smul.f32 %s1317, %s1350
    %v1352 = vstv %s1351
    %v1353 = vrsqrt.pop %v1352
    %v1354 = vmul.f32 %v1352, %v1353
    %vm1355 = vcmp.eq.f32.partialorder %v1352, inf
    %v1356 = vsel %vm1355, %v1352, %v1354
    %vm1357 = vcmp.eq.f32.partialorder %v1352, 0.0
    %v1358 = vand.u32 %v1352, 2147483648
    %v1359 = vsel %vm1357, %v1358, %v1356
    %s1360 = vtos %v1359
    %v1361 = vstv %s1360
    %v1362 = vrcp.pop %v1361
    %s1363 = vtos %v1362
    %s1364 = smul.f32 %s1283, %s1363
    %s1365 = scalar_lea.smem [#allocation5], 0
    %1366 = sst [smem:[%s1365]] %s1364
    %s1367 = scalar_lea.vmem %s2, 48
    %v1368 = vld [vmem:[%s1367] sm:$0xff]
    %v1369 = vld [vmem:[%s1367 + $0x8] sm:$0xff]
    %1370 = vmatprep.subr.mxu0 0.0
    %1371 = vmatpush1.msra.mxu0 %v1368
    %1372 = vmatprep.subr.mxu0 0.0
    %1373 = vmatpush1.msra.mxu0 %v1369
    %1374 = vmatprep.subr.mxu0 0.0
    %1375 = vmatpush1.msra.mxu0 0.0
    %1376 = vmatprep.subr.mxu0 0.0
    %1377 = vmatpush1.msra.mxu0 0.0
    %1378 = vmatprep.subr.mxu0 0.0
    %1379 = vmatpush1.msra.mxu0 0.0
    %1380 = vmatprep.subr.mxu0 0.0
    %1381 = vmatpush1.msra.mxu0 0.0
    %1382 = vmatprep.subr.mxu0 0.0
    %1383 = vmatpush1.msra.mxu0 0.0
    %1384 = vmatprep.subr.mxu0 0.0
    %1385 = vmatpush1.msra.mxu0 0.0
    %1386 = vmatprep.subr.mxu0 0.0
    %1387 = vmatpush1.msra.mxu0 0.0
    %1388 = vmatprep.subr.mxu0 0.0
    %1389 = vmatpush1.msra.mxu0 0.0
    %1390 = vmatprep.subr.mxu0 0.0
    %1391 = vmatpush1.msra.mxu0 0.0
    %1392 = vmatprep.subr.mxu0 0.0
    %1393 = vmatpush1.msra.mxu0 0.0
    %1394 = vmatprep.subr.mxu0 0.0
    %1395 = vmatpush1.msra.mxu0 0.0
    %1396 = vmatprep.subr.mxu0 0.0
    %1397 = vmatpush1.msra.mxu0 0.0
    %1398 = vmatprep.subr.mxu0 0.0
    %1399 = vmatpush1.msra.mxu0 0.0
    %1400 = vmatprep.subr.mxu0 0.0
    %1401 = vmatpush1.msra.mxu0 0.0
    %1402 = vmatprep.subr.mxu0 0.0
    %1403 = vmatpush1.msra.mxu0 0.0
    %1404 = vmatprep.subr.mxu0 0.0
    %1405 = vmatpush1.msra.mxu0 0.0
    %1406 = vmatprep.subr.mxu0 0.0
    %1407 = vmatpush1.msra.mxu0 0.0
    %1408 = vmatprep.subr.mxu0 0.0
    %1409 = vmatpush1.msra.mxu0 0.0
    %1410 = vmatprep.subr.mxu0 0.0
    %1411 = vmatpush1.msra.mxu0 0.0
    %1412 = vmatprep.subr.mxu0 0.0
    %1413 = vmatpush1.msra.mxu0 0.0
    %1414 = vmatprep.subr.mxu0 0.0
    %1415 = vmatpush1.msra.mxu0 0.0
    %1416 = vmatprep.subr.mxu0 0.0
    %1417 = vmatpush1.msra.mxu0 0.0
    %1418 = vmatprep.subr.mxu0 0.0
    %1419 = vmatpush1.msra.mxu0 0.0
    %1420 = vmatprep.subr.mxu0 0.0
    %1421 = vmatpush1.msra.mxu0 0.0
    %1422 = vmatprep.subr.mxu0 0.0
    %1423 = vmatpush1.msra.mxu0 0.0
    %1424 = vmatprep.subr.mxu0 0.0
    %1425 = vmatpush1.msra.mxu0 0.0
    %1426 = vmatprep.subr.mxu0 0.0
    %1427 = vmatpush1.msra.mxu0 0.0
    %1428 = vmatprep.subr.mxu0 0.0
    %1429 = vmatpush1.msra.mxu0 0.0
    %1430 = vmatprep.subr.mxu0 0.0
    %1431 = vmatpush1.msra.mxu0 0.0
    %1432 = vmatprep.subr.mxu0 0.0
    %1433 = vmatpush1.msra.mxu0 0.0
    %1434 = vmatprep.mubr.f32.mxu0 0.0
    %1435 = vmatmul.mubr.f32.gmra.mrb[0].mxu0 %v164
    %v1436 = vpop.f32.mrb[0].mxu0
    %v1437 = vadd.f32 0.0, %v1436
    %v1438 = vpop.f32.mrb[0].mxu0
    %1439 = vmatprep.mubr.f32.mxu0 0.0
    %1440 = vmatmul.mubr.f32.gmra.mrb[0].mxu0 %v167
    %v1441 = vpop.f32.mrb[0].mxu0
    %v1442 = vadd.f32 0.0, %v1441
    %v1443 = vpop.f32.mrb[0].mxu0
    %1444 = vmatprep.mubr.f32.mxu0 0.0
    %1445 = vmatmul.mubr.f32.gmra.mrb[0].mxu0 %v170
    %v1446 = vpop.f32.mrb[0].mxu0
    %v1447 = vadd.f32 0.0, %v1446
    %v1448 = vpop.f32.mrb[0].mxu0
    %1449 = vmatprep.mubr.f32.mxu0 0.0
    %1450 = vmatmul.mubr.f32.gmra.mrb[0].mxu0 %v173
    %v1451 = vpop.f32.mrb[0].mxu0
    %v1452 = vadd.f32 0.0, %v1451
    %v1453 = vpop.f32.mrb[0].mxu0
    %1454 = vmatprep.mubr.f32.mxu0 0.0
    %1455 = vmatmul.mubr.f32.gmra.mrb[0].mxu0 %v176
    %v1456 = vpop.f32.mrb[0].mxu0
    %v1457 = vadd.f32 0.0, %v1456
    %v1458 = vpop.f32.mrb[0].mxu0
    %1459 = vmatprep.mubr.f32.mxu0 0.0
    %1460 = vmatmul.mubr.f32.gmra.mrb[0].mxu0 %v179
    %v1461 = vpop.f32.mrb[0].mxu0
    %v1462 = vadd.f32 0.0, %v1461
    %v1463 = vpop.f32.mrb[0].mxu0
    %1464 = vmatprep.mubr.f32.mxu0 0.0
    %1465 = vmatmul.mubr.f32.gmra.mrb[0].mxu0 %v182
    %v1466 = vpop.f32.mrb[0].mxu0
    %v1467 = vadd.f32 0.0, %v1466
    %v1468 = vpop.f32.mrb[0].mxu0
    %1469 = vmatprep.mubr.f32.mxu0 0.0
    %1470 = vmatmul.mubr.f32.gmra.mrb[0].mxu0 %v185
    %v1471 = vpop.f32.mrb[0].mxu0
    %v1472 = vadd.f32 0.0, %v1471
    %v1473 = vpop.f32.mrb[0].mxu0
    %1474 = vmatprep.mubr.f32.mxu0 0.0
    %1475 = vmatmul.mubr.f32.gmra.mrb[0].mxu0 %v188
    %v1476 = vpop.f32.mrb[0].mxu0
    %v1477 = vadd.f32 0.0, %v1476
    %v1478 = vpop.f32.mrb[0].mxu0
    %1479 = vdwg.mxu0
    %v1480 = vmul.f32 %v1437, %v151
    %v1481 = vmul.f32 %v1442, %v152
    %v1482 = vmul.f32 %v1447, %v153
    %v1483 = vmul.f32 %v1452, %v154
    %v1484 = vmul.f32 %v1457, %v155
    %v1485 = vmul.f32 %v1462, %v156
    %v1486 = vmul.f32 %v1467, %v157
    %v1487 = vmul.f32 %v1472, %v158
    %v1488 = vmul.f32 %v1477, %v159
    %v1489 = vsel %vm162, %v1480, 0.0
    %1490 = vadd.xlane.f32.xlu0 %v1489
    %v1491 = vpop.xlane.xlu0 %1490
    %v1492 = vsel %vm162, %v1481, 0.0
    %1493 = vadd.xlane.f32.xlu0 %v1492
    %v1494 = vpop.xlane.xlu0 %1493
    %v1495 = vsel %vm162, %v1482, 0.0
    %1496 = vadd.xlane.f32.xlu0 %v1495
    %v1497 = vpop.xlane.xlu0 %1496
    %v1498 = vsel %vm162, %v1483, 0.0
    %1499 = vadd.xlane.f32.xlu0 %v1498
    %v1500 = vpop.xlane.xlu0 %1499
    %v1501 = vsel %vm162, %v1484, 0.0
    %1502 = vadd.xlane.f32.xlu0 %v1501
    %v1503 = vpop.xlane.xlu0 %1502
    %v1504 = vsel %vm162, %v1485, 0.0
    %1505 = vadd.xlane.f32.xlu0 %v1504
    %v1506 = vpop.xlane.xlu0 %1505
    %v1507 = vsel %vm162, %v1486, 0.0
    %1508 = vadd.xlane.f32.xlu0 %v1507
    %v1509 = vpop.xlane.xlu0 %1508
    %v1510 = vsel %vm162, %v1487, 0.0
    %1511 = vadd.xlane.f32.xlu0 %v1510
    %v1512 = vpop.xlane.xlu0 %1511
    %v1513 = vsel %vm333, %v1488, 0.0
    %1514 = vadd.xlane.f32.xlu0 %v1513
    %v1515 = vpop.xlane.xlu0 %1514
    %s1516 = scalar_lea.vmem %s2, 64
    %v1517 = vld [vmem:[%s1516] sm:$0xff]
    %v1518 = vld [vmem:[%s1516 + $0x8] sm:$0xff]
    %1519 = vmatprep.subr.mxu0 0.0
    %1520 = vmatpush1.msra.mxu0 %v1517
    %1521 = vmatprep.subr.mxu0 0.0
    %1522 = vmatpush1.msra.mxu0 %v1518
    %1523 = vmatprep.subr.mxu0 0.0
    %1524 = vmatpush1.msra.mxu0 0.0
    %1525 = vmatprep.subr.mxu0 0.0
    %1526 = vmatpush1.msra.mxu0 0.0
    %1527 = vmatprep.subr.mxu0 0.0
    %1528 = vmatpush1.msra.mxu0 0.0
    %1529 = vmatprep.subr.mxu0 0.0
    %1530 = vmatpush1.msra.mxu0 0.0
    %1531 = vmatprep.subr.mxu0 0.0
    %1532 = vmatpush1.msra.mxu0 0.0
    %1533 = vmatprep.subr.mxu0 0.0
    %1534 = vmatpush1.msra.mxu0 0.0
    %1535 = vmatprep.subr.mxu0 0.0
    %1536 = vmatpush1.msra.mxu0 0.0
    %1537 = vmatprep.subr.mxu0 0.0
    %1538 = vmatpush1.msra.mxu0 0.0
    %1539 = vmatprep.subr.mxu0 0.0
    %1540 = vmatpush1.msra.mxu0 0.0
    %1541 = vmatprep.subr.mxu0 0.0
    %1542 = vmatpush1.msra.mxu0 0.0
    %1543 = vmatprep.subr.mxu0 0.0
    %1544 = vmatpush1.msra.mxu0 0.0
    %1545 = vmatprep.subr.mxu0 0.0
    %1546 = vmatpush1.msra.mxu0 0.0
    %1547 = vmatprep.subr.mxu0 0.0
    %1548 = vmatpush1.msra.mxu0 0.0
    %1549 = vmatprep.subr.mxu0 0.0
    %1550 = vmatpush1.msra.mxu0 0.0
    %1551 = vmatprep.subr.mxu0 0.0
    %1552 = vmatpush1.msra.mxu0 0.0
    %1553 = vmatprep.subr.mxu0 0.0
    %1554 = vmatpush1.msra.mxu0 0.0
    %1555 = vmatprep.subr.mxu0 0.0
    %1556 = vmatpush1.msra.mxu0 0.0
    %1557 = vmatprep.subr.mxu0 0.0
    %1558 = vmatpush1.msra.mxu0 0.0
    %1559 = vmatprep.subr.mxu0 0.0
    %1560 = vmatpush1.msra.mxu0 0.0
    %1561 = vmatprep.subr.mxu0 0.0
    %1562 = vmatpush1.msra.mxu0 0.0
    %1563 = vmatprep.subr.mxu0 0.0
    %1564 = vmatpush1.msra.mxu0 0.0
    %1565 = vmatprep.subr.mxu0 0.0
    %1566 = vmatpush1.msra.mxu0 0.0
    %1567 = vmatprep.subr.mxu0 0.0
    %1568 = vmatpush1.msra.mxu0 0.0
    %1569 = vmatprep.subr.mxu0 0.0
    %1570 = vmatpush1.msra.mxu0 0.0
    %1571 = vmatprep.subr.mxu0 0.0
    %1572 = vmatpush1.msra.mxu0 0.0
    %1573 = vmatprep.subr.mxu0 0.0
    %1574 = vmatpush1.msra.mxu0 0.0
    %1575 = vmatprep.subr.mxu0 0.0
    %1576 = vmatpush1.msra.mxu0 0.0
    %1577 = vmatprep.subr.mxu0 0.0
    %1578 = vmatpush1.msra.mxu0 0.0
    %1579 = vmatprep.subr.mxu0 0.0
    %1580 = vmatpush1.msra.mxu0 0.0
    %1581 = vmatprep.subr.mxu0 0.0
    %1582 = vmatpush1.msra.mxu0 0.0
    %1583 = vmatprep.mubr.f32.mxu0 0.0
    %1584 = vmatmul.mubr.f32.gmra.mrb[0].mxu0 %v164
    %v1585 = vpop.f32.mrb[0].mxu0
    %v1586 = vadd.f32 0.0, %v1585
    %v1587 = vpop.f32.mrb[0].mxu0
    %1588 = vmatprep.mubr.f32.mxu0 0.0
    %1589 = vmatmul.mubr.f32.gmra.mrb[0].mxu0 %v167
    %v1590 = vpop.f32.mrb[0].mxu0
    %v1591 = vadd.f32 0.0, %v1590
    %v1592 = vpop.f32.mrb[0].mxu0
    %1593 = vmatprep.mubr.f32.mxu0 0.0
    %1594 = vmatmul.mubr.f32.gmra.mrb[0].mxu0 %v170
    %v1595 = vpop.f32.mrb[0].mxu0
    %v1596 = vadd.f32 0.0, %v1595
    %v1597 = vpop.f32.mrb[0].mxu0
    %1598 = vmatprep.mubr.f32.mxu0 0.0
    %1599 = vmatmul.mubr.f32.gmra.mrb[0].mxu0 %v173
    %v1600 = vpop.f32.mrb[0].mxu0
    %v1601 = vadd.f32 0.0, %v1600
    %v1602 = vpop.f32.mrb[0].mxu0
    %1603 = vmatprep.mubr.f32.mxu0 0.0
    %1604 = vmatmul.mubr.f32.gmra.mrb[0].mxu0 %v176
    %v1605 = vpop.f32.mrb[0].mxu0
    %v1606 = vadd.f32 0.0, %v1605
    %v1607 = vpop.f32.mrb[0].mxu0
    %1608 = vmatprep.mubr.f32.mxu0 0.0
    %1609 = vmatmul.mubr.f32.gmra.mrb[0].mxu0 %v179
    %v1610 = vpop.f32.mrb[0].mxu0
    %v1611 = vadd.f32 0.0, %v1610
    %v1612 = vpop.f32.mrb[0].mxu0
    %1613 = vmatprep.mubr.f32.mxu0 0.0
    %1614 = vmatmul.mubr.f32.gmra.mrb[0].mxu0 %v182
    %v1615 = vpop.f32.mrb[0].mxu0
    %v1616 = vadd.f32 0.0, %v1615
    %v1617 = vpop.f32.mrb[0].mxu0
    %1618 = vmatprep.mubr.f32.mxu0 0.0
    %1619 = vmatmul.mubr.f32.gmra.mrb[0].mxu0 %v185
    %v1620 = vpop.f32.mrb[0].mxu0
    %v1621 = vadd.f32 0.0, %v1620
    %v1622 = vpop.f32.mrb[0].mxu0
    %1623 = vmatprep.mubr.f32.mxu0 0.0
    %1624 = vmatmul.mubr.f32.gmra.mrb[0].mxu0 %v188
    %v1625 = vpop.f32.mrb[0].mxu0
    %v1626 = vadd.f32 0.0, %v1625
    %v1627 = vpop.f32.mrb[0].mxu0
    %1628 = vdwg.mxu0
    %v1629 = vmul.f32 %v1586, %v151
    %v1630 = vmul.f32 %v1591, %v152
    %v1631 = vmul.f32 %v1596, %v153
    %v1632 = vmul.f32 %v1601, %v154
    %v1633 = vmul.f32 %v1606, %v155
    %v1634 = vmul.f32 %v1611, %v156
    %v1635 = vmul.f32 %v1616, %v157
    %v1636 = vmul.f32 %v1621, %v158
    %v1637 = vmul.f32 %v1626, %v159
    %v1638 = vsel %vm162, %v1629, 0.0
    %1639 = vadd.xlane.f32.xlu0 %v1638
    %v1640 = vpop.xlane.xlu0 %1639
    %v1641 = vsel %vm162, %v1630, 0.0
    %1642 = vadd.xlane.f32.xlu0 %v1641
    %v1643 = vpop.xlane.xlu0 %1642
    %v1644 = vsel %vm162, %v1631, 0.0
    %1645 = vadd.xlane.f32.xlu0 %v1644
    %v1646 = vpop.xlane.xlu0 %1645
    %v1647 = vsel %vm162, %v1632, 0.0
    %1648 = vadd.xlane.f32.xlu0 %v1647
    %v1649 = vpop.xlane.xlu0 %1648
    %v1650 = vsel %vm162, %v1633, 0.0
    %1651 = vadd.xlane.f32.xlu0 %v1650
    %v1652 = vpop.xlane.xlu0 %1651
    %v1653 = vsel %vm162, %v1634, 0.0
    %1654 = vadd.xlane.f32.xlu0 %v1653
    %v1655 = vpop.xlane.xlu0 %1654
    %v1656 = vsel %vm162, %v1635, 0.0
    %1657 = vadd.xlane.f32.xlu0 %v1656
    %v1658 = vpop.xlane.xlu0 %1657
    %v1659 = vsel %vm162, %v1636, 0.0
    %1660 = vadd.xlane.f32.xlu0 %v1659
    %v1661 = vpop.xlane.xlu0 %1660
    %v1662 = vsel %vm333, %v1637, 0.0
    %1663 = vadd.xlane.f32.xlu0 %v1662
    %v1664 = vpop.xlane.xlu0 %1663
    %s1665 = scalar_lea.vmem %s2, 80
    %v1666 = vld [vmem:[%s1665] sm:$0xff]
    %v1667 = vld [vmem:[%s1665 + $0x8] sm:$0xff]
    %1668 = vmatprep.subr.mxu0 0.0
    %1669 = vmatpush1.msra.mxu0 %v1666
    %1670 = vmatprep.subr.mxu0 0.0
    %1671 = vmatpush1.msra.mxu0 %v1667
    %1672 = vmatprep.subr.mxu0 0.0
    %1673 = vmatpush1.msra.mxu0 0.0
    %1674 = vmatprep.subr.mxu0 0.0
    %1675 = vmatpush1.msra.mxu0 0.0
    %1676 = vmatprep.subr.mxu0 0.0
    %1677 = vmatpush1.msra.mxu0 0.0
    %1678 = vmatprep.subr.mxu0 0.0
    %1679 = vmatpush1.msra.mxu0 0.0
    %1680 = vmatprep.subr.mxu0 0.0
    %1681 = vmatpush1.msra.mxu0 0.0
    %1682 = vmatprep.subr.mxu0 0.0
    %1683 = vmatpush1.msra.mxu0 0.0
    %1684 = vmatprep.subr.mxu0 0.0
    %1685 = vmatpush1.msra.mxu0 0.0
    %1686 = vmatprep.subr.mxu0 0.0
    %1687 = vmatpush1.msra.mxu0 0.0
    %1688 = vmatprep.subr.mxu0 0.0
    %1689 = vmatpush1.msra.mxu0 0.0
    %1690 = vmatprep.subr.mxu0 0.0
    %1691 = vmatpush1.msra.mxu0 0.0
    %1692 = vmatprep.subr.mxu0 0.0
    %1693 = vmatpush1.msra.mxu0 0.0
    %1694 = vmatprep.subr.mxu0 0.0
    %1695 = vmatpush1.msra.mxu0 0.0
    %1696 = vmatprep.subr.mxu0 0.0
    %1697 = vmatpush1.msra.mxu0 0.0
    %1698 = vmatprep.subr.mxu0 0.0
    %1699 = vmatpush1.msra.mxu0 0.0
    %1700 = vmatprep.subr.mxu0 0.0
    %1701 = vmatpush1.msra.mxu0 0.0
    %1702 = vmatprep.subr.mxu0 0.0
    %1703 = vmatpush1.msra.mxu0 0.0
    %1704 = vmatprep.subr.mxu0 0.0
    %1705 = vmatpush1.msra.mxu0 0.0
    %1706 = vmatprep.subr.mxu0 0.0
    %1707 = vmatpush1.msra.mxu0 0.0
    %1708 = vmatprep.subr.mxu0 0.0
    %1709 = vmatpush1.msra.mxu0 0.0
    %1710 = vmatprep.subr.mxu0 0.0
    %1711 = vmatpush1.msra.mxu0 0.0
    %1712 = vmatprep.subr.mxu0 0.0
    %1713 = vmatpush1.msra.mxu0 0.0
    %1714 = vmatprep.subr.mxu0 0.0
    %1715 = vmatpush1.msra.mxu0 0.0
    %1716 = vmatprep.subr.mxu0 0.0
    %1717 = vmatpush1.msra.mxu0 0.0
    %1718 = vmatprep.subr.mxu0 0.0
    %1719 = vmatpush1.msra.mxu0 0.0
    %1720 = vmatprep.subr.mxu0 0.0
    %1721 = vmatpush1.msra.mxu0 0.0
    %1722 = vmatprep.subr.mxu0 0.0
    %1723 = vmatpush1.msra.mxu0 0.0
    %1724 = vmatprep.subr.mxu0 0.0
    %1725 = vmatpush1.msra.mxu0 0.0
    %1726 = vmatprep.subr.mxu0 0.0
    %1727 = vmatpush1.msra.mxu0 0.0
    %1728 = vmatprep.subr.mxu0 0.0
    %1729 = vmatpush1.msra.mxu0 0.0
    %1730 = vmatprep.subr.mxu0 0.0
    %1731 = vmatpush1.msra.mxu0 0.0
    %1732 = vmatprep.mubr.f32.mxu0 0.0
    %1733 = vmatmul.mubr.f32.gmra.mrb[0].mxu0 %v164
    %v1734 = vpop.f32.mrb[0].mxu0
    %v1735 = vadd.f32 0.0, %v1734
    %v1736 = vpop.f32.mrb[0].mxu0
    %1737 = vmatprep.mubr.f32.mxu0 0.0
    %1738 = vmatmul.mubr.f32.gmra.mrb[0].mxu0 %v167
    %v1739 = vpop.f32.mrb[0].mxu0
    %v1740 = vadd.f32 0.0, %v1739
    %v1741 = vpop.f32.mrb[0].mxu0
    %1742 = vmatprep.mubr.f32.mxu0 0.0
    %1743 = vmatmul.mubr.f32.gmra.mrb[0].mxu0 %v170
    %v1744 = vpop.f32.mrb[0].mxu0
    %v1745 = vadd.f32 0.0, %v1744
    %v1746 = vpop.f32.mrb[0].mxu0
    %1747 = vmatprep.mubr.f32.mxu0 0.0
    %1748 = vmatmul.mubr.f32.gmra.mrb[0].mxu0 %v173
    %v1749 = vpop.f32.mrb[0].mxu0
    %v1750 = vadd.f32 0.0, %v1749
    %v1751 = vpop.f32.mrb[0].mxu0
    %1752 = vmatprep.mubr.f32.mxu0 0.0
    %1753 = vmatmul.mubr.f32.gmra.mrb[0].mxu0 %v176
    %v1754 = vpop.f32.mrb[0].mxu0
    %v1755 = vadd.f32 0.0, %v1754
    %v1756 = vpop.f32.mrb[0].mxu0
    %1757 = vmatprep.mubr.f32.mxu0 0.0
    %1758 = vmatmul.mubr.f32.gmra.mrb[0].mxu0 %v179
    %v1759 = vpop.f32.mrb[0].mxu0
    %v1760 = vadd.f32 0.0, %v1759
    %v1761 = vpop.f32.mrb[0].mxu0
    %1762 = vmatprep.mubr.f32.mxu0 0.0
    %1763 = vmatmul.mubr.f32.gmra.mrb[0].mxu0 %v182
    %v1764 = vpop.f32.mrb[0].mxu0
    %v1765 = vadd.f32 0.0, %v1764
    %v1766 = vpop.f32.mrb[0].mxu0
    %1767 = vmatprep.mubr.f32.mxu0 0.0
    %1768 = vmatmul.mubr.f32.gmra.mrb[0].mxu0 %v185
    %v1769 = vpop.f32.mrb[0].mxu0
    %v1770 = vadd.f32 0.0, %v1769
    %v1771 = vpop.f32.mrb[0].mxu0
    %1772 = vmatprep.mubr.f32.mxu0 0.0
    %1773 = vmatmul.mubr.f32.gmra.mrb[0].mxu0 %v188
    %v1774 = vpop.f32.mrb[0].mxu0
    %v1775 = vadd.f32 0.0, %v1774
    %v1776 = vpop.f32.mrb[0].mxu0
    %1777 = vdwg.mxu0
    %v1778 = vmul.f32 %v1735, %v151
    %v1779 = vmul.f32 %v1740, %v152
    %v1780 = vmul.f32 %v1745, %v153
    %v1781 = vmul.f32 %v1750, %v154
    %v1782 = vmul.f32 %v1755, %v155
    %v1783 = vmul.f32 %v1760, %v156
    %v1784 = vmul.f32 %v1765, %v157
    %v1785 = vmul.f32 %v1770, %v158
    %v1786 = vmul.f32 %v1775, %v159
    %v1787 = vsel %vm162, %v1778, 0.0
    %1788 = vadd.xlane.f32.xlu0 %v1787
    %v1789 = vpop.xlane.xlu0 %1788
    %v1790 = vsel %vm162, %v1779, 0.0
    %1791 = vadd.xlane.f32.xlu0 %v1790
    %v1792 = vpop.xlane.xlu0 %1791
    %v1793 = vsel %vm162, %v1780, 0.0
    %1794 = vadd.xlane.f32.xlu0 %v1793
    %v1795 = vpop.xlane.xlu0 %1794
    %v1796 = vsel %vm162, %v1781, 0.0
    %1797 = vadd.xlane.f32.xlu0 %v1796
    %v1798 = vpop.xlane.xlu0 %1797
    %v1799 = vsel %vm162, %v1782, 0.0
    %1800 = vadd.xlane.f32.xlu0 %v1799
    %v1801 = vpop.xlane.xlu0 %1800
    %v1802 = vsel %vm162, %v1783, 0.0
    %1803 = vadd.xlane.f32.xlu0 %v1802
    %v1804 = vpop.xlane.xlu0 %1803
    %v1805 = vsel %vm162, %v1784, 0.0
    %1806 = vadd.xlane.f32.xlu0 %v1805
    %v1807 = vpop.xlane.xlu0 %1806
    %v1808 = vsel %vm162, %v1785, 0.0
    %1809 = vadd.xlane.f32.xlu0 %v1808
    %v1810 = vpop.xlane.xlu0 %1809
    %v1811 = vsel %vm333, %v1786, 0.0
    %1812 = vadd.xlane.f32.xlu0 %v1811
    %v1813 = vpop.xlane.xlu0 %1812
    %s1814 = scalar_lea.vmem [#allocation2], 48
    %v1815 = vld [vmem:[%s1814] sm:$0xff]
    %v1816 = vld [vmem:[%s1814 + $0x8] sm:$0xff]
    %1817 = vmatprep.subr.mxu0 0.0
    %1818 = vmatpush1.msra.mxu0 %v1815
    %1819 = vmatprep.subr.mxu0 0.0
    %1820 = vmatpush1.msra.mxu0 %v1816
    %1821 = vmatprep.subr.mxu0 0.0
    %1822 = vmatpush1.msra.mxu0 0.0
    %1823 = vmatprep.subr.mxu0 0.0
    %1824 = vmatpush1.msra.mxu0 0.0
    %1825 = vmatprep.subr.mxu0 0.0
    %1826 = vmatpush1.msra.mxu0 0.0
    %1827 = vmatprep.subr.mxu0 0.0
    %1828 = vmatpush1.msra.mxu0 0.0
    %1829 = vmatprep.subr.mxu0 0.0
    %1830 = vmatpush1.msra.mxu0 0.0
    %1831 = vmatprep.subr.mxu0 0.0
    %1832 = vmatpush1.msra.mxu0 0.0
    %1833 = vmatprep.subr.mxu0 0.0
    %1834 = vmatpush1.msra.mxu0 0.0
    %1835 = vmatprep.subr.mxu0 0.0
    %1836 = vmatpush1.msra.mxu0 0.0
    %1837 = vmatprep.subr.mxu0 0.0
    %1838 = vmatpush1.msra.mxu0 0.0
    %1839 = vmatprep.subr.mxu0 0.0
    %1840 = vmatpush1.msra.mxu0 0.0
    %1841 = vmatprep.subr.mxu0 0.0
    %1842 = vmatpush1.msra.mxu0 0.0
    %1843 = vmatprep.subr.mxu0 0.0
    %1844 = vmatpush1.msra.mxu0 0.0
    %1845 = vmatprep.subr.mxu0 0.0
    %1846 = vmatpush1.msra.mxu0 0.0
    %1847 = vmatprep.subr.mxu0 0.0
    %1848 = vmatpush1.msra.mxu0 0.0
    %1849 = vmatprep.subr.mxu0 0.0
    %1850 = vmatpush1.msra.mxu0 0.0
    %1851 = vmatprep.subr.mxu0 0.0
    %1852 = vmatpush1.msra.mxu0 0.0
    %1853 = vmatprep.subr.mxu0 0.0
    %1854 = vmatpush1.msra.mxu0 0.0
    %1855 = vmatprep.subr.mxu0 0.0
    %1856 = vmatpush1.msra.mxu0 0.0
    %1857 = vmatprep.subr.mxu0 0.0
    %1858 = vmatpush1.msra.mxu0 0.0
    %1859 = vmatprep.subr.mxu0 0.0
    %1860 = vmatpush1.msra.mxu0 0.0
    %1861 = vmatprep.subr.mxu0 0.0
    %1862 = vmatpush1.msra.mxu0 0.0
    %1863 = vmatprep.subr.mxu0 0.0
    %1864 = vmatpush1.msra.mxu0 0.0
    %1865 = vmatprep.subr.mxu0 0.0
    %1866 = vmatpush1.msra.mxu0 0.0
    %1867 = vmatprep.subr.mxu0 0.0
    %1868 = vmatpush1.msra.mxu0 0.0
    %1869 = vmatprep.subr.mxu0 0.0
    %1870 = vmatpush1.msra.mxu0 0.0
    %1871 = vmatprep.subr.mxu0 0.0
    %1872 = vmatpush1.msra.mxu0 0.0
    %1873 = vmatprep.subr.mxu0 0.0
    %1874 = vmatpush1.msra.mxu0 0.0
    %1875 = vmatprep.subr.mxu0 0.0
    %1876 = vmatpush1.msra.mxu0 0.0
    %1877 = vmatprep.subr.mxu0 0.0
    %1878 = vmatpush1.msra.mxu0 0.0
    %1879 = vmatprep.subr.mxu0 0.0
    %1880 = vmatpush1.msra.mxu0 0.0
    %1881 = vmatprep.mubr.f32.mxu0 0.0
    %1882 = vmatmul.mubr.f32.gmra.mrb[0].mxu0 %v164
    %v1883 = vpop.f32.mrb[0].mxu0
    %v1884 = vadd.f32 0.0, %v1883
    %v1885 = vpop.f32.mrb[0].mxu0
    %1886 = vmatprep.mubr.f32.mxu0 0.0
    %1887 = vmatmul.mubr.f32.gmra.mrb[0].mxu0 %v167
    %v1888 = vpop.f32.mrb[0].mxu0
    %v1889 = vadd.f32 0.0, %v1888
    %v1890 = vpop.f32.mrb[0].mxu0
    %1891 = vmatprep.mubr.f32.mxu0 0.0
    %1892 = vmatmul.mubr.f32.gmra.mrb[0].mxu0 %v170
    %v1893 = vpop.f32.mrb[0].mxu0
    %v1894 = vadd.f32 0.0, %v1893
    %v1895 = vpop.f32.mrb[0].mxu0
    %1896 = vmatprep.mubr.f32.mxu0 0.0
    %1897 = vmatmul.mubr.f32.gmra.mrb[0].mxu0 %v173
    %v1898 = vpop.f32.mrb[0].mxu0
    %v1899 = vadd.f32 0.0, %v1898
    %v1900 = vpop.f32.mrb[0].mxu0
    %1901 = vmatprep.mubr.f32.mxu0 0.0
    %1902 = vmatmul.mubr.f32.gmra.mrb[0].mxu0 %v176
    %v1903 = vpop.f32.mrb[0].mxu0
    %v1904 = vadd.f32 0.0, %v1903
    %v1905 = vpop.f32.mrb[0].mxu0
    %1906 = vmatprep.mubr.f32.mxu0 0.0
    %1907 = vmatmul.mubr.f32.gmra.mrb[0].mxu0 %v179
    %v1908 = vpop.f32.mrb[0].mxu0
    %v1909 = vadd.f32 0.0, %v1908
    %v1910 = vpop.f32.mrb[0].mxu0
    %1911 = vmatprep.mubr.f32.mxu0 0.0
    %1912 = vmatmul.mubr.f32.gmra.mrb[0].mxu0 %v182
    %v1913 = vpop.f32.mrb[0].mxu0
    %v1914 = vadd.f32 0.0, %v1913
    %v1915 = vpop.f32.mrb[0].mxu0
    %1916 = vmatprep.mubr.f32.mxu0 0.0
    %1917 = vmatmul.mubr.f32.gmra.mrb[0].mxu0 %v185
    %v1918 = vpop.f32.mrb[0].mxu0
    %v1919 = vadd.f32 0.0, %v1918
    %v1920 = vpop.f32.mrb[0].mxu0
    %1921 = vmatprep.mubr.f32.mxu0 0.0
    %1922 = vmatmul.mubr.f32.gmra.mrb[0].mxu0 %v188
    %v1923 = vpop.f32.mrb[0].mxu0
    %v1924 = vadd.f32 0.0, %v1923
    %v1925 = vpop.f32.mrb[0].mxu0
    %1926 = vdwg.mxu0
    %v1927 = vmul.f32 %v1884, %v151
    %v1928 = vmul.f32 %v1889, %v152
    %v1929 = vmul.f32 %v1894, %v153
    %v1930 = vmul.f32 %v1899, %v154
    %v1931 = vmul.f32 %v1904, %v155
    %v1932 = vmul.f32 %v1909, %v156
    %v1933 = vmul.f32 %v1914, %v157
    %v1934 = vmul.f32 %v1919, %v158
    %v1935 = vmul.f32 %v1924, %v159
    %v1936 = vsel %vm162, %v1927, 0.0
    %1937 = vadd.xlane.f32.xlu0 %v1936
    %v1938 = vpop.xlane.xlu0 %1937
    %v1939 = vsel %vm162, %v1928, 0.0
    %1940 = vadd.xlane.f32.xlu0 %v1939
    %v1941 = vpop.xlane.xlu0 %1940
    %v1942 = vsel %vm162, %v1929, 0.0
    %1943 = vadd.xlane.f32.xlu0 %v1942
    %v1944 = vpop.xlane.xlu0 %1943
    %v1945 = vsel %vm162, %v1930, 0.0
    %1946 = vadd.xlane.f32.xlu0 %v1945
    %v1947 = vpop.xlane.xlu0 %1946
    %v1948 = vsel %vm162, %v1931, 0.0
    %1949 = vadd.xlane.f32.xlu0 %v1948
    %v1950 = vpop.xlane.xlu0 %1949
    %v1951 = vsel %vm162, %v1932, 0.0
    %1952 = vadd.xlane.f32.xlu0 %v1951
    %v1953 = vpop.xlane.xlu0 %1952
    %v1954 = vsel %vm162, %v1933, 0.0
    %1955 = vadd.xlane.f32.xlu0 %v1954
    %v1956 = vpop.xlane.xlu0 %1955
    %v1957 = vsel %vm162, %v1934, 0.0
    %1958 = vadd.xlane.f32.xlu0 %v1957
    %v1959 = vpop.xlane.xlu0 %1958
    %v1960 = vsel %vm333, %v1935, 0.0
    %1961 = vadd.xlane.f32.xlu0 %v1960
    %v1962 = vpop.xlane.xlu0 %1961
    %s1963 = scalar_lea.vmem [#allocation2], 64
    %v1964 = vld [vmem:[%s1963] sm:$0xff]
    %v1965 = vld [vmem:[%s1963 + $0x8] sm:$0xff]
    %1966 = vmatprep.subr.mxu0 0.0
    %1967 = vmatpush1.msra.mxu0 %v1964
    %1968 = vmatprep.subr.mxu0 0.0
    %1969 = vmatpush1.msra.mxu0 %v1965
    %1970 = vmatprep.subr.mxu0 0.0
    %1971 = vmatpush1.msra.mxu0 0.0
    %1972 = vmatprep.subr.mxu0 0.0
    %1973 = vmatpush1.msra.mxu0 0.0
    %1974 = vmatprep.subr.mxu0 0.0
    %1975 = vmatpush1.msra.mxu0 0.0
    %1976 = vmatprep.subr.mxu0 0.0
    %1977 = vmatpush1.msra.mxu0 0.0
    %1978 = vmatprep.subr.mxu0 0.0
    %1979 = vmatpush1.msra.mxu0 0.0
    %1980 = vmatprep.subr.mxu0 0.0
    %1981 = vmatpush1.msra.mxu0 0.0
    %1982 = vmatprep.subr.mxu0 0.0
    %1983 = vmatpush1.msra.mxu0 0.0
    %1984 = vmatprep.subr.mxu0 0.0
    %1985 = vmatpush1.msra.mxu0 0.0
    %1986 = vmatprep.subr.mxu0 0.0
    %1987 = vmatpush1.msra.mxu0 0.0
    %1988 = vmatprep.subr.mxu0 0.0
    %1989 = vmatpush1.msra.mxu0 0.0
    %1990 = vmatprep.subr.mxu0 0.0
    %1991 = vmatpush1.msra.mxu0 0.0
    %1992 = vmatprep.subr.mxu0 0.0
    %1993 = vmatpush1.msra.mxu0 0.0
    %1994 = vmatprep.subr.mxu0 0.0
    %1995 = vmatpush1.msra.mxu0 0.0
    %1996 = vmatprep.subr.mxu0 0.0
    %1997 = vmatpush1.msra.mxu0 0.0
    %1998 = vmatprep.subr.mxu0 0.0
    %1999 = vmatpush1.msra.mxu0 0.0
    %2000 = vmatprep.subr.mxu0 0.0
    %2001 = vmatpush1.msra.mxu0 0.0
    %2002 = vmatprep.subr.mxu0 0.0
    %2003 = vmatpush1.msra.mxu0 0.0
    %2004 = vmatprep.subr.mxu0 0.0
    %2005 = vmatpush1.msra.mxu0 0.0
    %2006 = vmatprep.subr.mxu0 0.0
    %2007 = vmatpush1.msra.mxu0 0.0
    %2008 = vmatprep.subr.mxu0 0.0
    %2009 = vmatpush1.msra.mxu0 0.0
    %2010 = vmatprep.subr.mxu0 0.0
    %2011 = vmatpush1.msra.mxu0 0.0
    %2012 = vmatprep.subr.mxu0 0.0
    %2013 = vmatpush1.msra.mxu0 0.0
    %2014 = vmatprep.subr.mxu0 0.0
    %2015 = vmatpush1.msra.mxu0 0.0
    %2016 = vmatprep.subr.mxu0 0.0
    %2017 = vmatpush1.msra.mxu0 0.0
    %2018 = vmatprep.subr.mxu0 0.0
    %2019 = vmatpush1.msra.mxu0 0.0
    %2020 = vmatprep.subr.mxu0 0.0
    %2021 = vmatpush1.msra.mxu0 0.0
    %2022 = vmatprep.subr.mxu0 0.0
    %2023 = vmatpush1.msra.mxu0 0.0
    %2024 = vmatprep.subr.mxu0 0.0
    %2025 = vmatpush1.msra.mxu0 0.0
    %2026 = vmatprep.subr.mxu0 0.0
    %2027 = vmatpush1.msra.mxu0 0.0
    %2028 = vmatprep.subr.mxu0 0.0
    %2029 = vmatpush1.msra.mxu0 0.0
    %2030 = vmatprep.mubr.f32.mxu0 0.0
    %2031 = vmatmul.mubr.f32.gmra.mrb[0].mxu0 %v164
    %v2032 = vpop.f32.mrb[0].mxu0
    %v2033 = vadd.f32 0.0, %v2032
    %v2034 = vpop.f32.mrb[0].mxu0
    %2035 = vmatprep.mubr.f32.mxu0 0.0
    %2036 = vmatmul.mubr.f32.gmra.mrb[0].mxu0 %v167
    %v2037 = vpop.f32.mrb[0].mxu0
    %v2038 = vadd.f32 0.0, %v2037
    %v2039 = vpop.f32.mrb[0].mxu0
    %2040 = vmatprep.mubr.f32.mxu0 0.0
    %2041 = vmatmul.mubr.f32.gmra.mrb[0].mxu0 %v170
    %v2042 = vpop.f32.mrb[0].mxu0
    %v2043 = vadd.f32 0.0, %v2042
    %v2044 = vpop.f32.mrb[0].mxu0
    %2045 = vmatprep.mubr.f32.mxu0 0.0
    %2046 = vmatmul.mubr.f32.gmra.mrb[0].mxu0 %v173
    %v2047 = vpop.f32.mrb[0].mxu0
    %v2048 = vadd.f32 0.0, %v2047
    %v2049 = vpop.f32.mrb[0].mxu0
    %2050 = vmatprep.mubr.f32.mxu0 0.0
    %2051 = vmatmul.mubr.f32.gmra.mrb[0].mxu0 %v176
    %v2052 = vpop.f32.mrb[0].mxu0
    %v2053 = vadd.f32 0.0, %v2052
    %v2054 = vpop.f32.mrb[0].mxu0
    %2055 = vmatprep.mubr.f32.mxu0 0.0
    %2056 = vmatmul.mubr.f32.gmra.mrb[0].mxu0 %v179
    %v2057 = vpop.f32.mrb[0].mxu0
    %v2058 = vadd.f32 0.0, %v2057
    %v2059 = vpop.f32.mrb[0].mxu0
    %2060 = vmatprep.mubr.f32.mxu0 0.0
    %2061 = vmatmul.mubr.f32.gmra.mrb[0].mxu0 %v182
    %v2062 = vpop.f32.mrb[0].mxu0
    %v2063 = vadd.f32 0.0, %v2062
    %v2064 = vpop.f32.mrb[0].mxu0
    %2065 = vmatprep.mubr.f32.mxu0 0.0
    %2066 = vmatmul.mubr.f32.gmra.mrb[0].mxu0 %v185
    %v2067 = vpop.f32.mrb[0].mxu0
    %v2068 = vadd.f32 0.0, %v2067
    %v2069 = vpop.f32.mrb[0].mxu0
    %2070 = vmatprep.mubr.f32.mxu0 0.0
    %2071 = vmatmul.mubr.f32.gmra.mrb[0].mxu0 %v188
    %v2072 = vpop.f32.mrb[0].mxu0
    %v2073 = vadd.f32 0.0, %v2072
    %v2074 = vpop.f32.mrb[0].mxu0
    %2075 = vdwg.mxu0
    %v2076 = vmul.f32 %v2033, %v151
    %v2077 = vmul.f32 %v2038, %v152
    %v2078 = vmul.f32 %v2043, %v153
    %v2079 = vmul.f32 %v2048, %v154
    %v2080 = vmul.f32 %v2053, %v155
    %v2081 = vmul.f32 %v2058, %v156
    %v2082 = vmul.f32 %v2063, %v157
    %v2083 = vmul.f32 %v2068, %v158
    %v2084 = vmul.f32 %v2073, %v159
    %v2085 = vsel %vm162, %v2076, 0.0
    %2086 = vadd.xlane.f32.xlu0 %v2085
    %v2087 = vpop.xlane.xlu0 %2086
    %v2088 = vsel %vm162, %v2077, 0.0
    %2089 = vadd.xlane.f32.xlu0 %v2088
    %v2090 = vpop.xlane.xlu0 %2089
    %v2091 = vsel %vm162, %v2078, 0.0
    %2092 = vadd.xlane.f32.xlu0 %v2091
    %v2093 = vpop.xlane.xlu0 %2092
    %v2094 = vsel %vm162, %v2079, 0.0
    %2095 = vadd.xlane.f32.xlu0 %v2094
    %v2096 = vpop.xlane.xlu0 %2095
    %v2097 = vsel %vm162, %v2080, 0.0
    %2098 = vadd.xlane.f32.xlu0 %v2097
    %v2099 = vpop.xlane.xlu0 %2098
    %v2100 = vsel %vm162, %v2081, 0.0
    %2101 = vadd.xlane.f32.xlu0 %v2100
    %v2102 = vpop.xlane.xlu0 %2101
    %v2103 = vsel %vm162, %v2082, 0.0
    %2104 = vadd.xlane.f32.xlu0 %v2103
    %v2105 = vpop.xlane.xlu0 %2104
    %v2106 = vsel %vm162, %v2083, 0.0
    %2107 = vadd.xlane.f32.xlu0 %v2106
    %v2108 = vpop.xlane.xlu0 %2107
    %v2109 = vsel %vm333, %v2084, 0.0
    %2110 = vadd.xlane.f32.xlu0 %v2109
    %v2111 = vpop.xlane.xlu0 %2110
    %s2112 = scalar_lea.vmem [#allocation2], 80
    %v2113 = vld [vmem:[%s2112] sm:$0xff]
    %v2114 = vld [vmem:[%s2112 + $0x8] sm:$0xff]
    %2115 = vmatprep.subr.mxu0 0.0
    %2116 = vmatpush1.msra.mxu0 %v2113
    %2117 = vmatprep.subr.mxu0 0.0
    %2118 = vmatpush1.msra.mxu0 %v2114
    %2119 = vmatprep.subr.mxu0 0.0
    %2120 = vmatpush1.msra.mxu0 0.0
    %2121 = vmatprep.subr.mxu0 0.0
    %2122 = vmatpush1.msra.mxu0 0.0
    %2123 = vmatprep.subr.mxu0 0.0
    %2124 = vmatpush1.msra.mxu0 0.0
    %2125 = vmatprep.subr.mxu0 0.0
    %2126 = vmatpush1.msra.mxu0 0.0
    %2127 = vmatprep.subr.mxu0 0.0
    %2128 = vmatpush1.msra.mxu0 0.0
    %2129 = vmatprep.subr.mxu0 0.0
    %2130 = vmatpush1.msra.mxu0 0.0
    %2131 = vmatprep.subr.mxu0 0.0
    %2132 = vmatpush1.msra.mxu0 0.0
    %2133 = vmatprep.subr.mxu0 0.0
    %2134 = vmatpush1.msra.mxu0 0.0
    %2135 = vmatprep.subr.mxu0 0.0
    %2136 = vmatpush1.msra.mxu0 0.0
    %2137 = vmatprep.subr.mxu0 0.0
    %2138 = vmatpush1.msra.mxu0 0.0
    %2139 = vmatprep.subr.mxu0 0.0
    %2140 = vmatpush1.msra.mxu0 0.0
    %2141 = vmatprep.subr.mxu0 0.0
    %2142 = vmatpush1.msra.mxu0 0.0
    %2143 = vmatprep.subr.mxu0 0.0
    %2144 = vmatpush1.msra.mxu0 0.0
    %2145 = vmatprep.subr.mxu0 0.0
    %2146 = vmatpush1.msra.mxu0 0.0
    %2147 = vmatprep.subr.mxu0 0.0
    %2148 = vmatpush1.msra.mxu0 0.0
    %2149 = vmatprep.subr.mxu0 0.0
    %2150 = vmatpush1.msra.mxu0 0.0
    %2151 = vmatprep.subr.mxu0 0.0
    %2152 = vmatpush1.msra.mxu0 0.0
    %2153 = vmatprep.subr.mxu0 0.0
    %2154 = vmatpush1.msra.mxu0 0.0
    %2155 = vmatprep.subr.mxu0 0.0
    %2156 = vmatpush1.msra.mxu0 0.0
    %2157 = vmatprep.subr.mxu0 0.0
    %2158 = vmatpush1.msra.mxu0 0.0
    %2159 = vmatprep.subr.mxu0 0.0
    %2160 = vmatpush1.msra.mxu0 0.0
    %2161 = vmatprep.subr.mxu0 0.0
    %2162 = vmatpush1.msra.mxu0 0.0
    %2163 = vmatprep.subr.mxu0 0.0
    %2164 = vmatpush1.msra.mxu0 0.0
    %2165 = vmatprep.subr.mxu0 0.0
    %2166 = vmatpush1.msra.mxu0 0.0
    %2167 = vmatprep.subr.mxu0 0.0
    %2168 = vmatpush1.msra.mxu0 0.0
    %2169 = vmatprep.subr.mxu0 0.0
    %2170 = vmatpush1.msra.mxu0 0.0
    %2171 = vmatprep.subr.mxu0 0.0
    %2172 = vmatpush1.msra.mxu0 0.0
    %2173 = vmatprep.subr.mxu0 0.0
    %2174 = vmatpush1.msra.mxu0 0.0
    %2175 = vmatprep.subr.mxu0 0.0
    %2176 = vmatpush1.msra.mxu0 0.0
    %2177 = vmatprep.subr.mxu0 0.0
    %2178 = vmatpush1.msra.mxu0 0.0
    %2179 = vmatprep.mubr.f32.mxu0 0.0
    %2180 = vmatmul.mubr.f32.gmra.mrb[0].mxu0 %v164
    %v2181 = vpop.f32.mrb[0].mxu0
    %v2182 = vadd.f32 0.0, %v2181
    %v2183 = vpop.f32.mrb[0].mxu0
    %2184 = vmatprep.mubr.f32.mxu0 0.0
    %2185 = vmatmul.mubr.f32.gmra.mrb[0].mxu0 %v167
    %v2186 = vpop.f32.mrb[0].mxu0
    %v2187 = vadd.f32 0.0, %v2186
    %v2188 = vpop.f32.mrb[0].mxu0
    %2189 = vmatprep.mubr.f32.mxu0 0.0
    %2190 = vmatmul.mubr.f32.gmra.mrb[0].mxu0 %v170
    %v2191 = vpop.f32.mrb[0].mxu0
    %v2192 = vadd.f32 0.0, %v2191
    %v2193 = vpop.f32.mrb[0].mxu0
    %2194 = vmatprep.mubr.f32.mxu0 0.0
    %2195 = vmatmul.mubr.f32.gmra.mrb[0].mxu0 %v173
    %v2196 = vpop.f32.mrb[0].mxu0
    %v2197 = vadd.f32 0.0, %v2196
    %v2198 = vpop.f32.mrb[0].mxu0
    %2199 = vmatprep.mubr.f32.mxu0 0.0
    %2200 = vmatmul.mubr.f32.gmra.mrb[0].mxu0 %v176
    %v2201 = vpop.f32.mrb[0].mxu0
    %v2202 = vadd.f32 0.0, %v2201
    %v2203 = vpop.f32.mrb[0].mxu0
    %2204 = vmatprep.mubr.f32.mxu0 0.0
    %2205 = vmatmul.mubr.f32.gmra.mrb[0].mxu0 %v179
    %v2206 = vpop.f32.mrb[0].mxu0
    %v2207 = vadd.f32 0.0, %v2206
    %v2208 = vpop.f32.mrb[0].mxu0
    %2209 = vmatprep.mubr.f32.mxu0 0.0
    %2210 = vmatmul.mubr.f32.gmra.mrb[0].mxu0 %v182
    %v2211 = vpop.f32.mrb[0].mxu0
    %v2212 = vadd.f32 0.0, %v2211
    %v2213 = vpop.f32.mrb[0].mxu0
    %2214 = vmatprep.mubr.f32.mxu0 0.0
    %2215 = vmatmul.mubr.f32.gmra.mrb[0].mxu0 %v185
    %v2216 = vpop.f32.mrb[0].mxu0
    %v2217 = vadd.f32 0.0, %v2216
    %v2218 = vpop.f32.mrb[0].mxu0
    %2219 = vmatprep.mubr.f32.mxu0 0.0
    %2220 = vmatmul.mubr.f32.gmra.mrb[0].mxu0 %v188
    %v2221 = vpop.f32.mrb[0].mxu0
    %v2222 = vadd.f32 0.0, %v2221
    %v2223 = vpop.f32.mrb[0].mxu0
    %2224 = vdwg.mxu0
    %v2225 = vmul.f32 %v2182, %v151
    %v2226 = vmul.f32 %v2187, %v152
    %v2227 = vmul.f32 %v2192, %v153
    %v2228 = vmul.f32 %v2197, %v154
    %v2229 = vmul.f32 %v2202, %v155
    %v2230 = vmul.f32 %v2207, %v156
    %v2231 = vmul.f32 %v2212, %v157
    %v2232 = vmul.f32 %v2217, %v158
    %v2233 = vmul.f32 %v2222, %v159
    %v2234 = vsel %vm162, %v2225, 0.0
    %2235 = vadd.xlane.f32.xlu0 %v2234
    %v2236 = vpop.xlane.xlu0 %2235
    %v2237 = vsel %vm162, %v2226, 0.0
    %2238 = vadd.xlane.f32.xlu0 %v2237
    %v2239 = vpop.xlane.xlu0 %2238
    %v2240 = vsel %vm162, %v2227, 0.0
    %2241 = vadd.xlane.f32.xlu0 %v2240
    %v2242 = vpop.xlane.xlu0 %2241
    %v2243 = vsel %vm162, %v2228, 0.0
    %2244 = vadd.xlane.f32.xlu0 %v2243
    %v2245 = vpop.xlane.xlu0 %2244
    %v2246 = vsel %vm162, %v2229, 0.0
    %2247 = vadd.xlane.f32.xlu0 %v2246
    %v2248 = vpop.xlane.xlu0 %2247
    %v2249 = vsel %vm162, %v2230, 0.0
    %2250 = vadd.xlane.f32.xlu0 %v2249
    %v2251 = vpop.xlane.xlu0 %2250
    %v2252 = vsel %vm162, %v2231, 0.0
    %2253 = vadd.xlane.f32.xlu0 %v2252
    %v2254 = vpop.xlane.xlu0 %2253
    %v2255 = vsel %vm162, %v2232, 0.0
    %2256 = vadd.xlane.f32.xlu0 %v2255
    %v2257 = vpop.xlane.xlu0 %2256
    %v2258 = vsel %vm333, %v2233, 0.0
    %2259 = vadd.xlane.f32.xlu0 %v2258
    %v2260 = vpop.xlane.xlu0 %2259
    %v2261 = vsub.f32 %v1938, %v1491
    %v2262 = vsub.f32 %v1941, %v1494
    %v2263 = vsub.f32 %v1944, %v1497
    %v2264 = vsub.f32 %v1947, %v1500
    %v2265 = vsub.f32 %v1950, %v1503
    %v2266 = vsub.f32 %v1953, %v1506
    %v2267 = vsub.f32 %v1956, %v1509
    %v2268 = vsub.f32 %v1959, %v1512
    %v2269 = vsub.f32 %v1962, %v1515
    %v2270 = vsub.f32 %v2087, %v1640
    %v2271 = vsub.f32 %v2090, %v1643
    %v2272 = vsub.f32 %v2093, %v1646
    %v2273 = vsub.f32 %v2096, %v1649
    %v2274 = vsub.f32 %v2099, %v1652
    %v2275 = vsub.f32 %v2102, %v1655
    %v2276 = vsub.f32 %v2105, %v1658
    %v2277 = vsub.f32 %v2108, %v1661
    %v2278 = vsub.f32 %v2111, %v1664
    %v2279 = vsub.f32 %v2236, %v1789
    %v2280 = vsub.f32 %v2239, %v1792
    %v2281 = vsub.f32 %v2242, %v1795
    %v2282 = vsub.f32 %v2245, %v1798
    %v2283 = vsub.f32 %v2248, %v1801
    %v2284 = vsub.f32 %v2251, %v1804
    %v2285 = vsub.f32 %v2254, %v1807
    %v2286 = vsub.f32 %v2257, %v1810
    %v2287 = vsub.f32 %v2260, %v1813
    %v2288 = vsel %vm1108, %v2279, 0.0
    %v2289 = vsel %vm1108, %v2280, 0.0
    %v2290 = vadd.f32 %v2288, %v2289
    %v2291 = vsel %vm1108, %v2281, 0.0
    %v2292 = vadd.f32 %v2290, %v2291
    %v2293 = vsel %vm1108, %v2282, 0.0
    %v2294 = vadd.f32 %v2292, %v2293
    %v2295 = vsel %vm1108, %v2283, 0.0
    %v2296 = vadd.f32 %v2294, %v2295
    %v2297 = vsel %vm1108, %v2284, 0.0
    %v2298 = vadd.f32 %v2296, %v2297
    %v2299 = vsel %vm1108, %v2285, 0.0
    %v2300 = vadd.f32 %v2298, %v2299
    %v2301 = vsel %vm1108, %v2286, 0.0
    %v2302 = vadd.f32 %v2300, %v2301
    %v2303 = vsel %vm1124, %v2287, 0.0
    %v2304 = vadd.f32 %v2302, %v2303
    %2305 = vadd.xlane.f32.xlu0 %v2304
    %v2306 = vpop.xlane.xlu0 %2305
    %v2307 = vrot.slane %v2306, 4
    %v2308 = vadd.f32 %v2306, %v2307
    %v2309 = vrot.slane %v2308, 2
    %v2310 = vadd.f32 %v2308, %v2309
    %v2311 = vrot.slane %v2310, 1
    %v2312 = vadd.f32 %v2310, %v2311
    %s2313 = vtos %v2312
    %v2314 = vrcp.pop 68.0
    %s2315 = vtos %v2314
    %s2316 = smul.f32 %s2313, %s2315
    %v2317 = vstv %s2316
    %v2318 = vsub.f32 %v2279, %v2317
    %v2319 = vsub.f32 %v2280, %v2317
    %v2320 = vsub.f32 %v2281, %v2317
    %v2321 = vsub.f32 %v2282, %v2317
    %v2322 = vsub.f32 %v2283, %v2317
    %v2323 = vsub.f32 %v2284, %v2317
    %v2324 = vsub.f32 %v2285, %v2317
    %v2325 = vsub.f32 %v2286, %v2317
    %v2326 = vsub.f32 %v2287, %v2317
    %v2327 = vmul.f32 %v2261, %v2261
    %v2328 = vmul.f32 %v2262, %v2262
    %v2329 = vmul.f32 %v2263, %v2263
    %v2330 = vmul.f32 %v2264, %v2264
    %v2331 = vmul.f32 %v2265, %v2265
    %v2332 = vmul.f32 %v2266, %v2266
    %v2333 = vmul.f32 %v2267, %v2267
    %v2334 = vmul.f32 %v2268, %v2268
    %v2335 = vmul.f32 %v2269, %v2269
    %v2336 = vmul.f32 %v2270, %v2270
    %v2337 = vmul.f32 %v2271, %v2271
    %v2338 = vmul.f32 %v2272, %v2272
    %v2339 = vmul.f32 %v2273, %v2273
    %v2340 = vmul.f32 %v2274, %v2274
    %v2341 = vmul.f32 %v2275, %v2275
    %v2342 = vmul.f32 %v2276, %v2276
    %v2343 = vmul.f32 %v2277, %v2277
    %v2344 = vmul.f32 %v2278, %v2278
    %v2345 = vadd.f32 %v2327, %v2336
    %v2346 = vadd.f32 %v2328, %v2337
    %v2347 = vadd.f32 %v2329, %v2338
    %v2348 = vadd.f32 %v2330, %v2339
    %v2349 = vadd.f32 %v2331, %v2340
    %v2350 = vadd.f32 %v2332, %v2341
    %v2351 = vadd.f32 %v2333, %v2342
    %v2352 = vadd.f32 %v2334, %v2343
    %v2353 = vadd.f32 %v2335, %v2344
    %v2354 = vmul.f32 %v2318, %v2318
    %v2355 = vmul.f32 %v2319, %v2319
    %v2356 = vmul.f32 %v2320, %v2320
    %v2357 = vmul.f32 %v2321, %v2321
    %v2358 = vmul.f32 %v2322, %v2322
    %v2359 = vmul.f32 %v2323, %v2323
    %v2360 = vmul.f32 %v2324, %v2324
    %v2361 = vmul.f32 %v2325, %v2325
    %v2362 = vmul.f32 %v2326, %v2326
    %v2363 = vadd.f32 %v2345, %v2354
    %v2364 = vadd.f32 %v2346, %v2355
    %v2365 = vadd.f32 %v2347, %v2356
    %v2366 = vadd.f32 %v2348, %v2357
    %v2367 = vadd.f32 %v2349, %v2358
    %v2368 = vadd.f32 %v2350, %v2359
    %v2369 = vadd.f32 %v2351, %v2360
    %v2370 = vadd.f32 %v2352, %v2361
    %v2371 = vadd.f32 %v2353, %v2362
    %v2372 = vrsqrt.pop %v2363
    %v2373 = vmul.f32 %v2363, %v2372
    %vm2374 = vcmp.eq.f32.partialorder %v2363, inf
    %v2375 = vsel %vm2374, %v2363, %v2373
    %vm2376 = vcmp.eq.f32.partialorder %v2363, 0.0
    %v2377 = vand.u32 %v2363, 2147483648
    %v2378 = vsel %vm2376, %v2377, %v2375
    %v2379 = vrsqrt.pop %v2364
    %v2380 = vmul.f32 %v2364, %v2379
    %vm2381 = vcmp.eq.f32.partialorder %v2364, inf
    %v2382 = vsel %vm2381, %v2364, %v2380
    %vm2383 = vcmp.eq.f32.partialorder %v2364, 0.0
    %v2384 = vand.u32 %v2364, 2147483648
    %v2385 = vsel %vm2383, %v2384, %v2382
    %v2386 = vrsqrt.pop %v2365
    %v2387 = vmul.f32 %v2365, %v2386
    %vm2388 = vcmp.eq.f32.partialorder %v2365, inf
    %v2389 = vsel %vm2388, %v2365, %v2387
    %vm2390 = vcmp.eq.f32.partialorder %v2365, 0.0
    %v2391 = vand.u32 %v2365, 2147483648
    %v2392 = vsel %vm2390, %v2391, %v2389
    %v2393 = vrsqrt.pop %v2366
    %v2394 = vmul.f32 %v2366, %v2393
    %vm2395 = vcmp.eq.f32.partialorder %v2366, inf
    %v2396 = vsel %vm2395, %v2366, %v2394
    %vm2397 = vcmp.eq.f32.partialorder %v2366, 0.0
    %v2398 = vand.u32 %v2366, 2147483648
    %v2399 = vsel %vm2397, %v2398, %v2396
    %v2400 = vrsqrt.pop %v2367
    %v2401 = vmul.f32 %v2367, %v2400
    %vm2402 = vcmp.eq.f32.partialorder %v2367, inf
    %v2403 = vsel %vm2402, %v2367, %v2401
    %vm2404 = vcmp.eq.f32.partialorder %v2367, 0.0
    %v2405 = vand.u32 %v2367, 2147483648
    %v2406 = vsel %vm2404, %v2405, %v2403
    %v2407 = vrsqrt.pop %v2368
    %v2408 = vmul.f32 %v2368, %v2407
    %vm2409 = vcmp.eq.f32.partialorder %v2368, inf
    %v2410 = vsel %vm2409, %v2368, %v2408
    %vm2411 = vcmp.eq.f32.partialorder %v2368, 0.0
    %v2412 = vand.u32 %v2368, 2147483648
    %v2413 = vsel %vm2411, %v2412, %v2410
    %v2414 = vrsqrt.pop %v2369
    %v2415 = vmul.f32 %v2369, %v2414
    %vm2416 = vcmp.eq.f32.partialorder %v2369, inf
    %v2417 = vsel %vm2416, %v2369, %v2415
    %vm2418 = vcmp.eq.f32.partialorder %v2369, 0.0
    %v2419 = vand.u32 %v2369, 2147483648
    %v2420 = vsel %vm2418, %v2419, %v2417
    %v2421 = vrsqrt.pop %v2370
    %v2422 = vmul.f32 %v2370, %v2421
    %vm2423 = vcmp.eq.f32.partialorder %v2370, inf
    %v2424 = vsel %vm2423, %v2370, %v2422
    %vm2425 = vcmp.eq.f32.partialorder %v2370, 0.0
    %v2426 = vand.u32 %v2370, 2147483648
    %v2427 = vsel %vm2425, %v2426, %v2424
    %v2428 = vrsqrt.pop %v2371
    %v2429 = vmul.f32 %v2371, %v2428
    %vm2430 = vcmp.eq.f32.partialorder %v2371, inf
    %v2431 = vsel %vm2430, %v2371, %v2429
    %vm2432 = vcmp.eq.f32.partialorder %v2371, 0.0
    %v2433 = vand.u32 %v2371, 2147483648
    %v2434 = vsel %vm2432, %v2433, %v2431
    %v2435 = vsel %vm1108, %v2378, 0.0
    %v2436 = vsel %vm1108, %v2385, 0.0
    %v2437 = vadd.f32 %v2435, %v2436
    %v2438 = vsel %vm1108, %v2392, 0.0
    %v2439 = vadd.f32 %v2437, %v2438
    %v2440 = vsel %vm1108, %v2399, 0.0
    %v2441 = vadd.f32 %v2439, %v2440
    %v2442 = vsel %vm1108, %v2406, 0.0
    %v2443 = vadd.f32 %v2441, %v2442
    %v2444 = vsel %vm1108, %v2413, 0.0
    %v2445 = vadd.f32 %v2443, %v2444
    %v2446 = vsel %vm1108, %v2420, 0.0
    %v2447 = vadd.f32 %v2445, %v2446
    %v2448 = vsel %vm1108, %v2427, 0.0
    %v2449 = vadd.f32 %v2447, %v2448
    %v2450 = vsel %vm1124, %v2434, 0.0
    %v2451 = vadd.f32 %v2449, %v2450
    %2452 = vadd.xlane.f32.xlu0 %v2451
    %v2453 = vpop.xlane.xlu0 %2452
    %v2454 = vrot.slane %v2453, 4
    %v2455 = vadd.f32 %v2453, %v2454
    %v2456 = vrot.slane %v2455, 2
    %v2457 = vadd.f32 %v2455, %v2456
    %v2458 = vrot.slane %v2457, 1
    %v2459 = vadd.f32 %v2457, %v2458
    %s2460 = vtos %v2459
    %s2461 = smul.f32 %s2460, 0.014705882
    %v2462 = vmax.f32 %v1491, %v1503
    %v2463 = vmax.f32 %v1494, %v1506
    %v2464 = vmax.f32 %v1497, %v1509
    %v2465 = vmax.f32 %v1500, %v1512
    %v2466 = vsel %vm1288, %v1515, -inf
    %v2467 = vmax.f32 %v2462, %v2466
    %v2468 = vmax.f32 %v2467, %v2463
    %v2469 = vmax.f32 %v2464, %v2465
    %v2470 = vmax.f32 %v2468, %v2469
    %v2471 = vrot.slane %v2470, 4
    %v2472 = vmax.f32 %v2470, %v2471
    %v2473 = vrot.slane %v2472, 2
    %v2474 = vmax.f32 %v2472, %v2473
    %v2475 = vrot.slane %v2474, 1
    %v2476 = vmax.f32 %v2474, %v2475
    %s2477 = vtos %v2476
    %v2478 = vmin.f32 %v1491, %v1503
    %v2479 = vmin.f32 %v1494, %v1506
    %v2480 = vmin.f32 %v1497, %v1509
    %v2481 = vmin.f32 %v1500, %v1512
    %v2482 = vsel %vm1288, %v1515, inf
    %v2483 = vmin.f32 %v2478, %v2482
    %v2484 = vmin.f32 %v2483, %v2479
    %v2485 = vmin.f32 %v2480, %v2481
    %v2486 = vmin.f32 %v2484, %v2485
    %v2487 = vrot.slane %v2486, 4
    %v2488 = vmin.f32 %v2486, %v2487
    %v2489 = vrot.slane %v2488, 2
    %v2490 = vmin.f32 %v2488, %v2489
    %v2491 = vrot.slane %v2490, 1
    %v2492 = vmin.f32 %v2490, %v2491
    %s2493 = vtos %v2492
    %s2494 = ssub.f32 %s2477, %s2493
    %v2495 = vmax.f32 %v1640, %v1652
    %v2496 = vmax.f32 %v1643, %v1655
    %v2497 = vmax.f32 %v1646, %v1658
    %v2498 = vmax.f32 %v1649, %v1661
    %v2499 = vsel %vm1288, %v1664, -inf
    %v2500 = vmax.f32 %v2495, %v2499
    %v2501 = vmax.f32 %v2500, %v2496
    %v2502 = vmax.f32 %v2497, %v2498
    %v2503 = vmax.f32 %v2501, %v2502
    %v2504 = vrot.slane %v2503, 4
    %v2505 = vmax.f32 %v2503, %v2504
    %v2506 = vrot.slane %v2505, 2
    %v2507 = vmax.f32 %v2505, %v2506
    %v2508 = vrot.slane %v2507, 1
    %v2509 = vmax.f32 %v2507, %v2508
    %s2510 = vtos %v2509
    %v2511 = vmin.f32 %v1640, %v1652
    %v2512 = vmin.f32 %v1643, %v1655
    %v2513 = vmin.f32 %v1646, %v1658
    %v2514 = vmin.f32 %v1649, %v1661
    %v2515 = vsel %vm1288, %v1664, inf
    %v2516 = vmin.f32 %v2511, %v2515
    %v2517 = vmin.f32 %v2516, %v2512
    %v2518 = vmin.f32 %v2513, %v2514
    %v2519 = vmin.f32 %v2517, %v2518
    %v2520 = vrot.slane %v2519, 4
    %v2521 = vmin.f32 %v2519, %v2520
    %v2522 = vrot.slane %v2521, 2
    %v2523 = vmin.f32 %v2521, %v2522
    %v2524 = vrot.slane %v2523, 1
    %v2525 = vmin.f32 %v2523, %v2524
    %s2526 = vtos %v2525
    %s2527 = ssub.f32 %s2510, %s2526
    %s2528 = smul.f32 %s2494, %s2527
    %v2529 = vstv %s2528
    %v2530 = vrsqrt.pop %v2529
    %v2531 = vmul.f32 %v2529, %v2530
    %vm2532 = vcmp.eq.f32.partialorder %v2529, inf
    %v2533 = vsel %vm2532, %v2529, %v2531
    %vm2534 = vcmp.eq.f32.partialorder %v2529, 0.0
    %v2535 = vand.u32 %v2529, 2147483648
    %v2536 = vsel %vm2534, %v2535, %v2533
    %s2537 = vtos %v2536
    %v2538 = vstv %s2537
    %v2539 = vrcp.pop %v2538
    %s2540 = vtos %v2539
    %s2541 = smul.f32 %s2461, %s2540
    %s2542 = scalar_lea.smem [#allocation5], 128
    %2543 = sst [smem:[%s2542]] %s2541
    // Predicated region
    $region22: #{tpu_custom_call.1} parent=1 // pred_check
      _
    $region23: #{tpu_custom_call.1} parent=1 // pred_check_branch
      %2545 = sbr.rel (0) target = $region25
    $region24: #{tpu_custom_call.1} parent=1 // pred_region
      %s2547 = ssub.s32 32, 32
      %2548 = vsyncadd [#allocation4], %s2547
      %s2550 = sshll.u32 %s4, 4
      %s2551 = int_to_ptr.vmem [resolvable:$true] %s2550
      %2553 = dma.smem_to_vmem [#allocation5], 32, %s2551, [#allocation4]
    $region25: #{tpu_custom_call.1} parent=1 // pred_fallthru
      _
    // Predicated region
    $region26: #{tpu_custom_call.1} parent=1 // pred_check
      _
    $region27: #{tpu_custom_call.1} parent=1 // pred_check_branch
      %2555 = sbr.rel (0) target = $region29
    $region28: #{tpu_custom_call.1} parent=1 // pred_region
      %2556 = dma.done [#allocation4], 32
    $region29: #{tpu_custom_call.1} parent=1 // pred_fallthru
      _
    %2557 = sfence
    %2558 = vsyncpa [#allocation3], 1
    %2559 = vsyncpa [#allocation4], 1

</llo_original>
